<compile_context>
chip_gen: v6e
topology: v6e:2x2x1
jax: 0.10.0
libtpu: 0.0.40
codegen_flags: <defaults>
</compile_context>

<pallas_src>
import math
import jax
import jax.numpy as jnp
from jax.experimental import pallas as pl
from jax.experimental.pallas import tpu as pltpu  # noqa: F401  (kept for interpret-mode debugging)

# ---------------- config (small, consistent with the module) ----------------
B = 2            # batch
S = 8            # seq_len
E = 32           # embed_dim
H = 4            # num_heads
HD = E // H      # head_dim
F = 64           # ff_dim
N = B * S        # flattened token count
EPS = 1e-5       # nn.LayerNorm default eps

# ---- layout of the single packed parameter slab: (ROWS, 128) f32 ----
LANES = 128
R_WQKV = 0            # rows [0,32)   cols [0,96)   : [wq*1/sqrt(HD) | wk | wv]
R_WO   = 32           # rows [32,64)  cols [0,32)   : out_proj weight (head-concat rows)
R_W1   = 64           # rows [64,96)  cols [0,64)   : ff linear 1
R_W2   = 96           # rows [96,160) cols [0,32)   : ff linear 2
R_VEC  = 160          # rows 160..167 : bqkv, bo, g1, be1, bf1, bf2, g2, be2 (one per row)
R_MASK = 168          # rows [168,184) cols [0,16)  : additive block-diagonal mask (0 / -1e30)
ROWS   = 184          # multiple of 8


def _layernorm(x, gamma, beta):
    # x: (N, E); gamma/beta: (1, E). Biased variance, eps inside sqrt (PyTorch semantics).
    mu = jnp.mean(x, axis=-1, keepdims=True)
    xc = x - mu
    var = jnp.mean(xc * xc, axis=-1, keepdims=True)
    return xc * jax.lax.rsqrt(var + EPS) * gamma + beta


def transformer_layer_kernel(x_ref, p_ref, o_ref):
    x = x_ref[...]                                              # (N, E)

    # ---- static views into the single packed parameter slab (no runtime index math) ----
    wqkv = p_ref[R_WQKV:R_WQKV + E, 0:3 * E]                    # (32, 96)
    wo   = p_ref[R_WO:R_WO + E,     0:E]                        # (32, 32)
    w1   = p_ref[R_W1:R_W1 + E,     0:F]                        # (32, 64)
    w2   = p_ref[R_W2:R_W2 + F,     0:E]                        # (64, 32)
    bqkv = p_ref[R_VEC + 0:R_VEC + 1, 0:3 * E]                  # (1, 96)
    bo   = p_ref[R_VEC + 1:R_VEC + 2, 0:E]
    g1   = p_ref[R_VEC + 2:R_VEC + 3, 0:E]
    be1  = p_ref[R_VEC + 3:R_VEC + 4, 0:E]
    bf1  = p_ref[R_VEC + 4:R_VEC + 5, 0:F]
    bf2  = p_ref[R_VEC + 5:R_VEC + 6, 0:E]
    g2   = p_ref[R_VEC + 6:R_VEC + 7, 0:E]
    be2  = p_ref[R_VEC + 7:R_VEC + 8, 0:E]
    mask = p_ref[R_MASK:R_MASK + N, 0:N]                        # (N, N) additive 0/-1e30

    # ---- fused QKV projection: one (16,32)@(32,96) MXU push + one bias add ----
    qkv = jnp.dot(x, wqkv, preferred_element_type=jnp.float32) + bqkv   # (N, 96)

    # ---- split heads (static lane slices, stacked along a new leading batch dim) ----
    def split_heads(m):                                         # (N, E) -> (H, N, HD)
        return jnp.stack([m[:, h * HD:(h + 1) * HD] for h in range(H)])

    qh = split_heads(qkv[:, 0:E])                               # (H, N, HD) -- pre-scaled
    kh = split_heads(qkv[:, E:2 * E])
    vh = split_heads(qkv[:, 2 * E:3 * E])

    # ---- head-batched attention over the flattened B*S axis ----
    s = jnp.einsum("hqd,hkd->hqk", qh, kh,
                   preferred_element_type=jnp.float32)          # (H, N, N)
    s = s + mask                                                # precomputed block-diag mask
    s = s - jnp.max(s, axis=-1, keepdims=True)
    p = jnp.exp(s)
    p = p * pl.reciprocal(jnp.sum(p, axis=-1, keepdims=True), approx=False)
    ctx = jnp.einsum("hqk,hkd->hqd", p, vh,
                     preferred_element_type=jnp.float32)        # (H, N, HD)

    # ---- concat heads -> (N, E); single K=32 output projection (one MXU push) ----
    ctx_cat = jnp.concatenate([ctx[h] for h in range(H)], axis=1)       # (N, E)
    attn = jnp.dot(ctx_cat, wo, preferred_element_type=jnp.float32) + bo

    # ---- residual + LayerNorm 1 (dropout = identity) ----
    y1 = _layernorm(x + attn, g1, be1)

    # ---- feed-forward: Linear -> ReLU -> Linear (dropouts = identity) ----
    h1 = jnp.maximum(jnp.dot(y1, w1, preferred_element_type=jnp.float32) + bf1, 0.0)
    ff = jnp.dot(h1, w2, preferred_element_type=jnp.float32) + bf2

    # ---- residual + LayerNorm 2 ----
    o_ref[...] = _layernorm(y1 + ff, g2, be2)


def pack_params(p):
    """Host-side, run ONCE (outside jit): fold 1/sqrt(HD) into Q, concatenate every
    weight/bias/gamma/beta and the additive attention mask into one (184,128) f32 slab."""
    scale = 1.0 / math.sqrt(HD)
    pbuf = jnp.zeros((ROWS, LANES), jnp.float32)

    wqkv = jnp.concatenate([p["wq"] * scale, p["wk"], p["wv"]], axis=1)   # (E, 3E)
    bqkv = jnp.concatenate([p["bq"] * scale, p["bk"], p["bv"]], axis=1)   # (1, 3E)

    pbuf = pbuf.at[R_WQKV:R_WQKV + E, 0:3 * E].set(wqkv)
    pbuf = pbuf.at[R_WO:R_WO + E, 0:E].set(p["wo"])
    pbuf = pbuf.at[R_W1:R_W1 + E, 0:F].set(p["w1"])
    pbuf = pbuf.at[R_W2:R_W2 + F, 0:E].set(p["w2"])

    vecs = [(bqkv[0], 3 * E), (p["bo"][0], E), (p["g1"][0], E), (p["be1"][0], E),
            (p["bf1"][0], F), (p["bf2"][0], E), (p["g2"][0], E), (p["be2"][0], E)]
    for i, (v, w) in enumerate(vecs):
        pbuf = pbuf.at[R_VEC + i, 0:w].set(v)

    # block-diagonal additive mask: tokens only attend within their own batch element
    blk = jnp.arange(N) // S
    mask = jnp.where(blk[:, None] == blk[None, :], 0.0, -1e30).astype(jnp.float32)
    pbuf = pbuf.at[R_MASK:R_MASK + N, 0:N].set(mask)
    return pbuf


@jax.jit
def transformer_layer(x, pbuf):
    """x: (B, S, E) float32. pbuf: pre-packed (ROWS, 128) parameter slab from pack_params."""
    xf = x.reshape(N, E)   # collapse batch: one kernel invocation, no grid
    out = pl.pallas_call(
        transformer_layer_kernel,
        out_shape=jax.ShapeDtypeStruct((N, E), jnp.float32),
        # No grid / no BlockSpecs: the two operands (~92 KiB + 2 KiB) are staged whole
        # into VMEM -> 2 input DMAs + 1 output DMA total.
    )(xf, pbuf)
    return out.reshape(B, S, E)


def init_params(key):
    """Deterministic synthetic parameters. Linear weights stored as (in, out)
    (transpose of PyTorch's (out, in)); biases as (1, out)."""
    ks = jax.random.split(key, 8)

    def lin(k, din, dout):
        w = jax.random.normal(k, (din, dout), jnp.float32) * 0.02
        b = jnp.zeros((1, dout), jnp.float32)
        return w, b

    wq, bq = lin(ks[0], E, E)
    wk, bk = lin(ks[1], E, E)
    wv, bv = lin(ks[2], E, E)
    wo, bo = lin(ks[3], E, E)
    w1, bf1 = lin(ks[4], E, F)
    w2, bf2 = lin(ks[5], F, E)
    g1 = jnp.ones((1, E), jnp.float32)
    be1 = jnp.zeros((1, E), jnp.float32)
    g2 = jnp.ones((1, E), jnp.float32)
    be2 = jnp.zeros((1, E), jnp.float32)
    return dict(wq=wq, bq=bq, wk=wk, bk=bk, wv=wv, bv=bv, wo=wo, bo=bo,
                g1=g1, be1=be1, w1=w1, bf1=bf1, w2=w2, bf2=bf2,
                g2=g2, be2=be2)


def reference(x, p):
    # Pure-JAX reference with the PyTorch module's semantics (eval mode).
    def ln(z, g, b):
        mu = jnp.mean(z, -1, keepdims=True)
        var = jnp.mean((z - mu) ** 2, -1, keepdims=True)
        return (z - mu) / jnp.sqrt(var + EPS) * g + b

    q = x @ p["wq"] + p["bq"]
    k = x @ p["wk"] + p["bk"]
    v = x @ p["wv"] + p["bv"]
    q = q.reshape(B, S, H, HD).transpose(0, 2, 1, 3)
    k = k.reshape(B, S, H, HD).transpose(0, 2, 1, 3)
    v = v.reshape(B, S, H, HD).transpose(0, 2, 1, 3)
    sc = jnp.einsum("bhqd,bhkd->bhqk", q, k) / math.sqrt(HD)
    a = jax.nn.softmax(sc, axis=-1)
    ctx = jnp.einsum("bhqk,bhkd->bhqd", a, v).transpose(0, 2, 1, 3).reshape(B, S, E)
    attn = ctx @ p["wo"] + p["bo"]
    y1 = ln(x + attn, p["g1"], p["be1"])
    ff = jnp.maximum(y1 @ p["w1"] + p["bf1"], 0.0) @ p["w2"] + p["bf2"]
    return ln(y1 + ff, p["g2"], p["be2"])


if __name__ == "__main__":
    key = jax.random.PRNGKey(0)
    kx, kp = jax.random.split(key)
    x = jax.random.normal(kx, (B, S, E), jnp.float32)
    params = init_params(kp)

    # pack once, outside the jitted forward path
    pbuf = jax.block_until_ready(pack_params(params))

    out = transformer_layer(x, pbuf)
    out = jax.block_until_ready(out)

    ref = reference(x, params)
    assert out.shape == (B, S, E)
    assert jnp.allclose(out, ref, atol=5e-4, rtol=5e-4), "mismatch vs reference"
    print("KERNEL_OK")
</pallas_src>

<mosaic_0001>
module attributes {stable_mosaic.version = 11 : i64} {
  func.func @transformer_layer_kernel(%arg0: memref<16x32xf32, #tpu.memory_space<vmem>>, %arg1: memref<184x128xf32, #tpu.memory_space<vmem>>, %arg2: memref<16x32xf32, #tpu.memory_space<vmem>>) attributes {dimension_semantics = [], scalar_prefetch = 0 : i64, scratch_operands = 0 : i64, tpu.core_type = #tpu.core_type<tc>} {
    %c0 = arith.constant 0 : index
    %c0_0 = arith.constant 0 : index
    %0 = vector.load %arg0[%c0, %c0_0] : memref<16x32xf32, #tpu.memory_space<vmem>>, vector<16x32xf32>
    %c0_1 = arith.constant 0 : index
    %c0_2 = arith.constant 0 : index
    %1 = vector.load %arg1[%c0_1, %c0_2] : memref<184x128xf32, #tpu.memory_space<vmem>>, vector<32x96xf32>
    %c32 = arith.constant 32 : index
    %c0_3 = arith.constant 0 : index
    %2 = vector.load %arg1[%c32, %c0_3] : memref<184x128xf32, #tpu.memory_space<vmem>>, vector<32x32xf32>
    %c64 = arith.constant 64 : index
    %c0_4 = arith.constant 0 : index
    %3 = vector.load %arg1[%c64, %c0_4] : memref<184x128xf32, #tpu.memory_space<vmem>>, vector<32x64xf32>
    %c96 = arith.constant 96 : index
    %c0_5 = arith.constant 0 : index
    %4 = vector.load %arg1[%c96, %c0_5] : memref<184x128xf32, #tpu.memory_space<vmem>>, vector<64x32xf32>
    %c160 = arith.constant 160 : index
    %c0_6 = arith.constant 0 : index
    %5 = vector.load %arg1[%c160, %c0_6] : memref<184x128xf32, #tpu.memory_space<vmem>>, vector<1x96xf32>
    %c161 = arith.constant 161 : index
    %c0_7 = arith.constant 0 : index
    %6 = vector.load %arg1[%c161, %c0_7] : memref<184x128xf32, #tpu.memory_space<vmem>>, vector<1x32xf32>
    %c162 = arith.constant 162 : index
    %c0_8 = arith.constant 0 : index
    %7 = vector.load %arg1[%c162, %c0_8] : memref<184x128xf32, #tpu.memory_space<vmem>>, vector<1x32xf32>
    %c163 = arith.constant 163 : index
    %c0_9 = arith.constant 0 : index
    %8 = vector.load %arg1[%c163, %c0_9] : memref<184x128xf32, #tpu.memory_space<vmem>>, vector<1x32xf32>
    %c164 = arith.constant 164 : index
    %c0_10 = arith.constant 0 : index
    %9 = vector.load %arg1[%c164, %c0_10] : memref<184x128xf32, #tpu.memory_space<vmem>>, vector<1x64xf32>
    %c165 = arith.constant 165 : index
    %c0_11 = arith.constant 0 : index
    %10 = vector.load %arg1[%c165, %c0_11] : memref<184x128xf32, #tpu.memory_space<vmem>>, vector<1x32xf32>
    %c166 = arith.constant 166 : index
    %c0_12 = arith.constant 0 : index
    %11 = vector.load %arg1[%c166, %c0_12] : memref<184x128xf32, #tpu.memory_space<vmem>>, vector<1x32xf32>
    %c167 = arith.constant 167 : index
    %c0_13 = arith.constant 0 : index
    %12 = vector.load %arg1[%c167, %c0_13] : memref<184x128xf32, #tpu.memory_space<vmem>>, vector<1x32xf32>
    %c168 = arith.constant 168 : index
    %c0_14 = arith.constant 0 : index
    %13 = vector.load %arg1[%c168, %c0_14] : memref<184x128xf32, #tpu.memory_space<vmem>>, vector<16x16xf32>
    %cst = arith.constant dense<0.000000e+00> : vector<16x96xf32>
    %14 = tpu.matmul %0, %1, %cst {dimension_numbers = #tpu.dot_dimension_numbers<[1], [0], [0], [1], [0, 0, 1, 1], [], []>} : vector<16x32xf32>, vector<32x96xf32>, vector<16x96xf32> -> vector<16x96xf32>
    %15 = vector.broadcast %5 : vector<1x96xf32> to vector<16x96xf32>
    %16 = arith.addf %14, %15 : vector<16x96xf32>
    %17 = vector.extract_strided_slice %16 {offsets = [0, 0], sizes = [16, 32], strides = [1, 1]} : vector<16x96xf32> to vector<16x32xf32>
    %18 = vector.extract_strided_slice %17 {offsets = [0, 0], sizes = [16, 8], strides = [1, 1]} : vector<16x32xf32> to vector<16x8xf32>
    %19 = vector.extract_strided_slice %17 {offsets = [0, 8], sizes = [16, 8], strides = [1, 1]} : vector<16x32xf32> to vector<16x8xf32>
    %20 = vector.extract_strided_slice %17 {offsets = [0, 16], sizes = [16, 8], strides = [1, 1]} : vector<16x32xf32> to vector<16x8xf32>
    %21 = vector.extract_strided_slice %17 {offsets = [0, 24], sizes = [16, 8], strides = [1, 1]} : vector<16x32xf32> to vector<16x8xf32>
    %22 = vector.shape_cast %18 : vector<16x8xf32> to vector<1x16x8xf32>
    %23 = vector.shape_cast %19 : vector<16x8xf32> to vector<1x16x8xf32>
    %24 = vector.shape_cast %20 : vector<16x8xf32> to vector<1x16x8xf32>
    %25 = vector.shape_cast %21 : vector<16x8xf32> to vector<1x16x8xf32>
    %26 = tpu.concatenate %22, %23, %24, %25 in 0 : vector<1x16x8xf32>, vector<1x16x8xf32>, vector<1x16x8xf32>, vector<1x16x8xf32> -> vector<4x16x8xf32>
    %27 = vector.extract_strided_slice %16 {offsets = [0, 32], sizes = [16, 32], strides = [1, 1]} : vector<16x96xf32> to vector<16x32xf32>
    %28 = vector.extract_strided_slice %27 {offsets = [0, 0], sizes = [16, 8], strides = [1, 1]} : vector<16x32xf32> to vector<16x8xf32>
    %29 = vector.extract_strided_slice %27 {offsets = [0, 8], sizes = [16, 8], strides = [1, 1]} : vector<16x32xf32> to vector<16x8xf32>
    %30 = vector.extract_strided_slice %27 {offsets = [0, 16], sizes = [16, 8], strides = [1, 1]} : vector<16x32xf32> to vector<16x8xf32>
    %31 = vector.extract_strided_slice %27 {offsets = [0, 24], sizes = [16, 8], strides = [1, 1]} : vector<16x32xf32> to vector<16x8xf32>
    %32 = vector.shape_cast %28 : vector<16x8xf32> to vector<1x16x8xf32>
    %33 = vector.shape_cast %29 : vector<16x8xf32> to vector<1x16x8xf32>
    %34 = vector.shape_cast %30 : vector<16x8xf32> to vector<1x16x8xf32>
    %35 = vector.shape_cast %31 : vector<16x8xf32> to vector<1x16x8xf32>
    %36 = tpu.concatenate %32, %33, %34, %35 in 0 : vector<1x16x8xf32>, vector<1x16x8xf32>, vector<1x16x8xf32>, vector<1x16x8xf32> -> vector<4x16x8xf32>
    %37 = vector.extract_strided_slice %16 {offsets = [0, 64], sizes = [16, 32], strides = [1, 1]} : vector<16x96xf32> to vector<16x32xf32>
    %38 = vector.extract_strided_slice %37 {offsets = [0, 0], sizes = [16, 8], strides = [1, 1]} : vector<16x32xf32> to vector<16x8xf32>
    %39 = vector.extract_strided_slice %37 {offsets = [0, 8], sizes = [16, 8], strides = [1, 1]} : vector<16x32xf32> to vector<16x8xf32>
    %40 = vector.extract_strided_slice %37 {offsets = [0, 16], sizes = [16, 8], strides = [1, 1]} : vector<16x32xf32> to vector<16x8xf32>
    %41 = vector.extract_strided_slice %37 {offsets = [0, 24], sizes = [16, 8], strides = [1, 1]} : vector<16x32xf32> to vector<16x8xf32>
    %42 = vector.shape_cast %38 : vector<16x8xf32> to vector<1x16x8xf32>
    %43 = vector.shape_cast %39 : vector<16x8xf32> to vector<1x16x8xf32>
    %44 = vector.shape_cast %40 : vector<16x8xf32> to vector<1x16x8xf32>
    %45 = vector.shape_cast %41 : vector<16x8xf32> to vector<1x16x8xf32>
    %46 = tpu.concatenate %42, %43, %44, %45 in 0 : vector<1x16x8xf32>, vector<1x16x8xf32>, vector<1x16x8xf32>, vector<1x16x8xf32> -> vector<4x16x8xf32>
    "tpu.trace_start"() <{level = 10 : i32, message = "hqd,hkd->hqk"}> : () -> ()
    %cst_15 = arith.constant dense<0.000000e+00> : vector<4x16x16xf32>
    %47 = tpu.matmul %26, %36, %cst_15 {dimension_numbers = #tpu.dot_dimension_numbers<[2], [2], [1], [1], [0, 0, 0, 1, 1, 1], [0], [0]>} : vector<4x16x8xf32>, vector<4x16x8xf32>, vector<4x16x16xf32> -> vector<4x16x16xf32>
    "tpu.trace_stop"() : () -> ()
    %48 = vector.shape_cast %13 : vector<16x16xf32> to vector<1x16x16xf32>
    %49 = vector.broadcast %48 : vector<1x16x16xf32> to vector<4x16x16xf32>
    %50 = arith.addf %47, %49 : vector<4x16x16xf32>
    %cst_16 = arith.constant dense<0xFF800000> : vector<4x16xf32>
    %51 = vector.multi_reduction <maximumf>, %50, %cst_16 [2] : vector<4x16x16xf32> to vector<4x16xf32>
    %52 = vector.shape_cast %51 : vector<4x16xf32> to vector<4x16x1xf32>
    %53 = vector.broadcast %52 : vector<4x16x1xf32> to vector<4x16x16xf32>
    %54 = arith.subf %50, %53 : vector<4x16x16xf32>
    %55 = math.exp %54 : vector<4x16x16xf32>
    %cst_17 = arith.constant dense<0.000000e+00> : vector<4x16xf32>
    %56 = vector.multi_reduction <add>, %55, %cst_17 [2] : vector<4x16x16xf32> to vector<4x16xf32>
    %57 = vector.shape_cast %56 : vector<4x16xf32> to vector<4x16x1xf32>
    %58 = tpu.reciprocal %57 : vector<4x16x1xf32> -> vector<4x16x1xf32>
    %59 = vector.broadcast %58 : vector<4x16x1xf32> to vector<4x16x16xf32>
    %60 = arith.mulf %55, %59 : vector<4x16x16xf32>
    "tpu.trace_start"() <{level = 10 : i32, message = "hqk,hkd->hqd"}> : () -> ()
    %cst_18 = arith.constant dense<0.000000e+00> : vector<4x16x8xf32>
    %61 = tpu.matmul %60, %46, %cst_18 {dimension_numbers = #tpu.dot_dimension_numbers<[2], [1], [1], [2], [0, 0, 0, 1, 1, 2], [0], [0]>} : vector<4x16x16xf32>, vector<4x16x8xf32>, vector<4x16x8xf32> -> vector<4x16x8xf32>
    "tpu.trace_stop"() : () -> ()
    %62 = vector.extract_strided_slice %61 {offsets = [0, 0, 0], sizes = [1, 16, 8], strides = [1, 1, 1]} : vector<4x16x8xf32> to vector<1x16x8xf32>
    %63 = vector.shape_cast %62 : vector<1x16x8xf32> to vector<16x8xf32>
    %64 = vector.extract_strided_slice %61 {offsets = [1, 0, 0], sizes = [1, 16, 8], strides = [1, 1, 1]} : vector<4x16x8xf32> to vector<1x16x8xf32>
    %65 = vector.shape_cast %64 : vector<1x16x8xf32> to vector<16x8xf32>
    %66 = vector.extract_strided_slice %61 {offsets = [2, 0, 0], sizes = [1, 16, 8], strides = [1, 1, 1]} : vector<4x16x8xf32> to vector<1x16x8xf32>
    %67 = vector.shape_cast %66 : vector<1x16x8xf32> to vector<16x8xf32>
    %68 = vector.extract_strided_slice %61 {offsets = [3, 0, 0], sizes = [1, 16, 8], strides = [1, 1, 1]} : vector<4x16x8xf32> to vector<1x16x8xf32>
    %69 = vector.shape_cast %68 : vector<1x16x8xf32> to vector<16x8xf32>
    %70 = tpu.concatenate %63, %65, %67, %69 in 1 : vector<16x8xf32>, vector<16x8xf32>, vector<16x8xf32>, vector<16x8xf32> -> vector<16x32xf32>
    %cst_19 = arith.constant dense<0.000000e+00> : vector<16x32xf32>
    %71 = tpu.matmul %70, %2, %cst_19 {dimension_numbers = #tpu.dot_dimension_numbers<[1], [0], [0], [1], [0, 0, 1, 1], [], []>} : vector<16x32xf32>, vector<32x32xf32>, vector<16x32xf32> -> vector<16x32xf32>
    %72 = vector.broadcast %6 : vector<1x32xf32> to vector<16x32xf32>
    %73 = arith.addf %71, %72 : vector<16x32xf32>
    %74 = arith.addf %0, %73 : vector<16x32xf32>
    %cst_20 = arith.constant dense<0.000000e+00> : vector<16xf32>
    %75 = vector.multi_reduction <add>, %74, %cst_20 [1] : vector<16x32xf32> to vector<16xf32>
    %76 = vector.shape_cast %75 : vector<16xf32> to vector<16x1xf32>
    %cst_21 = arith.constant 3.200000e+01 : f32
    %77 = vector.broadcast %cst_21 : f32 to vector<16x1xf32>
    %78 = arith.divf %76, %77 : vector<16x1xf32>
    %79 = vector.broadcast %78 : vector<16x1xf32> to vector<16x32xf32>
    %80 = arith.subf %74, %79 : vector<16x32xf32>
    %81 = arith.mulf %80, %80 : vector<16x32xf32>
    %cst_22 = arith.constant dense<0.000000e+00> : vector<16xf32>
    %82 = vector.multi_reduction <add>, %81, %cst_22 [1] : vector<16x32xf32> to vector<16xf32>
    %83 = vector.shape_cast %82 : vector<16xf32> to vector<16x1xf32>
    %cst_23 = arith.constant 3.200000e+01 : f32
    %84 = vector.broadcast %cst_23 : f32 to vector<16x1xf32>
    %85 = arith.divf %83, %84 : vector<16x1xf32>
    %cst_24 = arith.constant 9.99999974E-6 : f32
    %86 = vector.broadcast %cst_24 : f32 to vector<16x1xf32>
    %87 = arith.addf %85, %86 : vector<16x1xf32>
    %88 = math.rsqrt %87 : vector<16x1xf32>
    %89 = vector.broadcast %88 : vector<16x1xf32> to vector<16x32xf32>
    %90 = arith.mulf %80, %89 : vector<16x32xf32>
    %91 = vector.broadcast %7 : vector<1x32xf32> to vector<16x32xf32>
    %92 = arith.mulf %90, %91 : vector<16x32xf32>
    %93 = vector.broadcast %8 : vector<1x32xf32> to vector<16x32xf32>
    %94 = arith.addf %92, %93 : vector<16x32xf32>
    %cst_25 = arith.constant dense<0.000000e+00> : vector<16x64xf32>
    %95 = tpu.matmul %94, %3, %cst_25 {dimension_numbers = #tpu.dot_dimension_numbers<[1], [0], [0], [1], [0, 0, 1, 1], [], []>} : vector<16x32xf32>, vector<32x64xf32>, vector<16x64xf32> -> vector<16x64xf32>
    %96 = vector.broadcast %9 : vector<1x64xf32> to vector<16x64xf32>
    %97 = arith.addf %95, %96 : vector<16x64xf32>
    %cst_26 = arith.constant 0.000000e+00 : f32
    %98 = vector.broadcast %cst_26 : f32 to vector<16x64xf32>
    %99 = arith.maximumf %97, %98 : vector<16x64xf32>
    %cst_27 = arith.constant dense<0.000000e+00> : vector<16x32xf32>
    %100 = tpu.matmul %99, %4, %cst_27 {dimension_numbers = #tpu.dot_dimension_numbers<[1], [0], [0], [1], [0, 0, 1, 1], [], []>} : vector<16x64xf32>, vector<64x32xf32>, vector<16x32xf32> -> vector<16x32xf32>
    %101 = vector.broadcast %10 : vector<1x32xf32> to vector<16x32xf32>
    %102 = arith.addf %100, %101 : vector<16x32xf32>
    %103 = arith.addf %94, %102 : vector<16x32xf32>
    %cst_28 = arith.constant dense<0.000000e+00> : vector<16xf32>
    %104 = vector.multi_reduction <add>, %103, %cst_28 [1] : vector<16x32xf32> to vector<16xf32>
    %105 = vector.shape_cast %104 : vector<16xf32> to vector<16x1xf32>
    %cst_29 = arith.constant 3.200000e+01 : f32
    %106 = vector.broadcast %cst_29 : f32 to vector<16x1xf32>
    %107 = arith.divf %105, %106 : vector<16x1xf32>
    %108 = vector.broadcast %107 : vector<16x1xf32> to vector<16x32xf32>
    %109 = arith.subf %103, %108 : vector<16x32xf32>
    %110 = arith.mulf %109, %109 : vector<16x32xf32>
    %cst_30 = arith.constant dense<0.000000e+00> : vector<16xf32>
    %111 = vector.multi_reduction <add>, %110, %cst_30 [1] : vector<16x32xf32> to vector<16xf32>
    %112 = vector.shape_cast %111 : vector<16xf32> to vector<16x1xf32>
    %cst_31 = arith.constant 3.200000e+01 : f32
    %113 = vector.broadcast %cst_31 : f32 to vector<16x1xf32>
    %114 = arith.divf %112, %113 : vector<16x1xf32>
    %cst_32 = arith.constant 9.99999974E-6 : f32
    %115 = vector.broadcast %cst_32 : f32 to vector<16x1xf32>
    %116 = arith.addf %114, %115 : vector<16x1xf32>
    %117 = math.rsqrt %116 : vector<16x1xf32>
    %118 = vector.broadcast %117 : vector<16x1xf32> to vector<16x32xf32>
    %119 = arith.mulf %109, %118 : vector<16x32xf32>
    %120 = vector.broadcast %11 : vector<1x32xf32> to vector<16x32xf32>
    %121 = arith.mulf %119, %120 : vector<16x32xf32>
    %122 = vector.broadcast %12 : vector<1x32xf32> to vector<16x32xf32>
    %123 = arith.addf %121, %122 : vector<16x32xf32>
    %c0_33 = arith.constant 0 : index
    %c0_34 = arith.constant 0 : index
    %124 = vector.load %arg2[%c0_33, %c0_34] : memref<16x32xf32, #tpu.memory_space<vmem>>, vector<16x32xf32>
    tpu.vector_store %arg2[%c0_33, %c0_34], %123 {strides = array<i32>} : memref<16x32xf32, #tpu.memory_space<vmem>>, vector<16x32xf32>,
    return
  }
}

</mosaic_0001>

<llo_original>
// kernel: transformer_layer.1
$region0: #{transformer_layer.1}
  #allocation0 [shape = 'u32[]', space=smem, size = 0x4, offset = 0x4, fixed_abs, tag = 'smem constant byte address 0x4 - core index']
  #allocation1 [shape = 'u32[144,128]{1,0:T(1,128)}', space=vmem, size = 0x12000, scoped, tag = 'internal scratch']
  %s0 = inlined_call_operand.hbm [shape: f32[16,32], index: 0, kind: input, shape index: {}]
  %s1 = inlined_call_operand.hbm [shape: f32[184,128], index: 1, kind: input, shape index: {}]
  %s2 = inlined_call_operand.hbm [shape: f32[16,32], index: 2, kind: output, shape index: {}]
  %s3 = sld [smem:[#allocation0]]
  $region26: #{transformer_layer.1} parent=0
    _
  %s5 = ssub.s32 1, %s3
  %s6 = scalar_select 0, %s5, %s3
  $region1: #{transformer_layer.1} parent=0
    #allocation2 [shape = 'u8[8192]{0}', space=vmem, size = 0x2000, scoped, tag = 'input window, operand 0, single buffered']
    #allocation3 [shape = 's32[1]{0}', space=sflag, size = 0x4, scoped, tag = 'scoped memory for transformer_layer.1']
    #allocation4 [shape = 's32[1]{0}', space=sflag, size = 0x4, scoped, tag = 'scoped memory for transformer_layer.1']
    #allocation5 [shape = 'u8[94208]{0}', space=vmem, size = 0x17000, scoped, tag = 'input window, operand 1, single buffered']
    #allocation6 [shape = 's32[1]{0}', space=sflag, size = 0x4, scoped, tag = 'scoped memory for transformer_layer.1']
    #allocation7 [shape = 'u8[8192]{0}', space=vmem, size = 0x2000, scoped, tag = 'output window, operand 0, single buffered']
    %7 = vsyncpa [#allocation3], 0
    %8 = vsyncpa [#allocation6], 0
    %9 = vsyncpa [#allocation4], 0
    // Predicated region
    $region2: #{transformer_layer.1} parent=1 // pred_check
      _
    $region3: #{transformer_layer.1} parent=1 // pred_check_branch
      %11 = sbr.rel (0) target = $region5
    $region4: #{transformer_layer.1} parent=1 // pred_region
      %s13 = ssub.s32 256, 256
      %14 = vsyncadd [#allocation3], %s13
      %s15 = sshll.u32 [#allocation2], 4
      %s16 = int_to_ptr.vmem [resolvable:$true] %s15
      %21 = dma.hbm_to_vmem [thread:$0]  %s0, 256, %s16, [#allocation3], 128, 128, 8
    $region5: #{transformer_layer.1} parent=1 // pred_fallthru
      _
    // Predicated region
    $region6: #{transformer_layer.1} parent=1 // pred_check
      _
    $region7: #{transformer_layer.1} parent=1 // pred_check_branch
      %23 = sbr.rel (0) target = $region9
    $region8: #{transformer_layer.1} parent=1 // pred_region
      %s25 = ssub.s32 2944, 2944
      %26 = vsyncadd [#allocation6], %s25
      %s27 = sshll.u32 [#allocation5], 4
      %s28 = int_to_ptr.vmem [resolvable:$true] %s27
      %33 = dma.hbm_to_vmem [thread:$0]  %s1, 2944, %s28, [#allocation6], 128, 128, 8
    $region9: #{transformer_layer.1} parent=1 // pred_fallthru
      _
    // Predicated region
    $region10: #{transformer_layer.1} parent=1 // pred_check
      _
    $region11: #{transformer_layer.1} parent=1 // pred_check_branch
      %35 = sbr.rel (0) target = $region13
    $region12: #{transformer_layer.1} parent=1 // pred_region
      %36 = dma.done [#allocation3], 256
    $region13: #{transformer_layer.1} parent=1 // pred_fallthru
      _
    // Predicated region
    $region14: #{transformer_layer.1} parent=1 // pred_check
      _
    $region15: #{transformer_layer.1} parent=1 // pred_check_branch
      %38 = sbr.rel (0) target = $region17
    $region16: #{transformer_layer.1} parent=1 // pred_region
      %39 = dma.done [#allocation6], 2944
    $region17: #{transformer_layer.1} parent=1 // pred_fallthru
      _
    %v40 = vld [vmem:[#allocation2] sm:$0xff]
    %v41 = vld [vmem:[#allocation2 + $0x8] sm:$0xff]
    %v42 = vld [vmem:[#allocation5] sm:$0xff]
    %v43 = vld [vmem:[#allocation5 + $0x8] sm:$0xff]
    %v44 = vld [vmem:[#allocation5 + $0x10] sm:$0xff]
    %v45 = vld [vmem:[#allocation5 + $0x18] sm:$0xff]
    %v46 = vld [vmem:[#allocation5 + $0x20] sm:$0xff]
    %v47 = vld [vmem:[#allocation5 + $0x28] sm:$0xff]
    %v48 = vld [vmem:[#allocation5 + $0x30] sm:$0xff]
    %v49 = vld [vmem:[#allocation5 + $0x38] sm:$0xff]
    %v50 = vld [vmem:[#allocation5 + $0x40] sm:$0xff]
    %v51 = vld [vmem:[#allocation5 + $0x48] sm:$0xff]
    %v52 = vld [vmem:[#allocation5 + $0x50] sm:$0xff]
    %v53 = vld [vmem:[#allocation5 + $0x58] sm:$0xff]
    %v54 = vld [vmem:[#allocation5 + $0x60] sm:$0xff]
    %v55 = vld [vmem:[#allocation5 + $0x68] sm:$0xff]
    %v56 = vld [vmem:[#allocation5 + $0x70] sm:$0xff]
    %v57 = vld [vmem:[#allocation5 + $0x78] sm:$0xff]
    %v58 = vld [vmem:[#allocation5 + $0x80] sm:$0xff]
    %v59 = vld [vmem:[#allocation5 + $0x88] sm:$0xff]
    %v60 = vld [vmem:[#allocation5 + $0x90] sm:$0xff]
    %v61 = vld [vmem:[#allocation5 + $0x98] sm:$0xff]
    %v62 = vld [vmem:[#allocation5 + $0xa0] sm:$0x1]
    %v63 = vld [vmem:[#allocation5 + $0xa1] sm:$0x1]
    %v64 = vld [vmem:[#allocation5 + $0xa2] sm:$0x1]
    %v65 = vld [vmem:[#allocation5 + $0xa3] sm:$0x1]
    %v66 = vld [vmem:[#allocation5 + $0xa4] sm:$0x1]
    %v67 = vld [vmem:[#allocation5 + $0xa5] sm:$0x1]
    %v68 = vld [vmem:[#allocation5 + $0xa6] sm:$0x1]
    %v69 = vld [vmem:[#allocation5 + $0xa7] sm:$0x1]
    %v70 = vld [vmem:[#allocation5 + $0xa8] sm:$0xff]
    %v71 = vld [vmem:[#allocation5 + $0xb0] sm:$0xff]
    %v72 = vlaneseq
    %v73 = vshrl.u32 %v72, 7
    %v74 = vsub.s32 0, %v73
    %v75 = vrot.slane %v62, %v74
    %vm76 = vcmask 261120
    %v78 = vsel %vm76, %v40, 0
    %v81 = vsel %vm76, %v41, 0
    %83 = vmatprep.subr.mxu0 0.0
    %84 = vmatpush1.msra.mxu0 0.0
    %85 = vmatprep.subr.mxu0 0.0
    %86 = vmatpush1.msra.mxu0 0.0
    %87 = vmatprep.subr.mxu0 0.0
    %88 = vmatpush1.msra.mxu0 0.0
    %89 = vmatprep.subr.mxu0 0.0
    %90 = vmatpush1.msra.mxu0 0.0
    %91 = vmatprep.subr.mxu0 0.0
    %92 = vmatpush1.msra.mxu0 0.0
    %93 = vmatprep.subr.mxu0 0.0
    %94 = vmatpush1.msra.mxu0 0.0
    %95 = vmatprep.subr.mxu0 0.0
    %96 = vmatpush1.msra.mxu0 0.0
    %97 = vmatprep.subr.mxu0 0.0
    %98 = vmatpush1.msra.mxu0 0.0
    %99 = vmatprep.subr.mxu0 0.0
    %100 = vmatpush1.msra.mxu0 0.0
    %101 = vmatprep.subr.mxu0 0.0
    %102 = vmatpush1.msra.mxu0 0.0
    %103 = vmatprep.subr.mxu0 0.0
    %104 = vmatpush1.msra.mxu0 0.0
    %105 = vmatprep.subr.mxu0 0.0
    %106 = vmatpush1.msra.mxu0 0.0
    %107 = vmatprep.subr.mxu0 0.0
    %108 = vmatpush1.msra.mxu0 %v45
    %109 = vmatprep.subr.mxu0 0.0
    %110 = vmatpush1.msra.mxu0 %v44
    %111 = vmatprep.subr.mxu0 0.0
    %112 = vmatpush1.msra.mxu0 %v43
    %113 = vmatprep.subr.mxu0 0.0
    %114 = vmatpush1.msra.mxu0 %v42
    %115 = vmatprep.subr.mxu0 0.0
    %116 = vmatpush2.msra.mxu0 0.0
    %117 = vmatprep.subr.mxu0 0.0
    %118 = vmatpush2.msra.mxu0 0.0
    %119 = vmatprep.subr.mxu0 0.0
    %120 = vmatpush2.msra.mxu0 0.0
    %121 = vmatprep.subr.mxu0 0.0
    %122 = vmatpush2.msra.mxu0 0.0
    %123 = vmatprep.subr.mxu0 0.0
    %124 = vmatpush2.msra.mxu0 0.0
    %125 = vmatprep.subr.mxu0 0.0
    %126 = vmatpush2.msra.mxu0 0.0
    %127 = vmatprep.subr.mxu0 0.0
    %128 = vmatpush2.msra.mxu0 0.0
    %129 = vmatprep.subr.mxu0 0.0
    %130 = vmatpush2.msra.mxu0 0.0
    %131 = vmatprep.subr.mxu0 0.0
    %132 = vmatpush2.msra.mxu0 0.0
    %133 = vmatprep.subr.mxu0 0.0
    %134 = vmatpush2.msra.mxu0 0.0
    %135 = vmatprep.subr.mxu0 0.0
    %136 = vmatpush2.msra.mxu0 0.0
    %137 = vmatprep.subr.mxu0 0.0
    %138 = vmatpush2.msra.mxu0 0.0
    %139 = vmatprep.subr.mxu0 0.0
    %140 = vmatpush2.msra.mxu0 0.0
    %141 = vmatprep.subr.mxu0 0.0
    %142 = vmatpush2.msra.mxu0 0.0
    %143 = vmatprep.subr.mxu0 0.0
    %144 = vmatpush2.msra.mxu0 0.0
    %145 = vmatprep.subr.mxu0 0.0
    %146 = vmatpush2.msra.mxu0 0.0
    %147 = vmatprep.mubr.f32.mxu0 0.0
    %148 = vmatmul.mubr.f32.gmra.mxu0 %v78
    %v149 = vpop.f32.mrf.mxu0
    %v150 = vadd.f32 %v75, %v149
    %v151 = vpop.f32.mrf.mxu0
    %152 = vmatprep.mubr.f32.mxu0 0.0
    %153 = vmatmul.mubr.f32.gmra.mxu0 %v81
    %v154 = vpop.f32.mrf.mxu0
    %v155 = vadd.f32 %v75, %v154
    %v156 = vpop.f32.mrf.mxu0
    %157 = vdwg.mxu0
    %160 = vrot.lane.b32.xlu0 %v150, 120
    %v161 = vpop.permute.xlu0 %160
    %162 = vrot.lane.b32.xlu0 %v155, 120
    %v163 = vpop.permute.xlu0 %162
    %164 = vrot.lane.b32.xlu0 %v150, 112
    %v165 = vpop.permute.xlu0 %164
    %166 = vrot.lane.b32.xlu0 %v155, 112
    %v167 = vpop.permute.xlu0 %166
    %168 = vrot.lane.b32.xlu0 %v150, 104
    %v169 = vpop.permute.xlu0 %168
    %170 = vrot.lane.b32.xlu0 %v155, 104
    %v171 = vpop.permute.xlu0 %170
    %172 = vrot.lane.b32.xlu0 %v150, 96
    %v173 = vpop.permute.xlu0 %172
    %174 = vrot.lane.b32.xlu0 %v155, 96
    %v175 = vpop.permute.xlu0 %174
    %vm176 = vcmask 64512
    %v177 = vsel %vm176, %v150, 0
    %v179 = vsel %vm176, %v155, 0
    %v181 = vsel %vm176, %v173, 0
    %v183 = vsel %vm176, %v175, 0
    %185 = vmatprep.subr.mxu0 0.0
    %186 = vmatpush1.xpose.msra.mxu0 0.0
    %187 = vmatprep.subr.mxu0 0.0
    %188 = vmatpush1.xpose.msra.mxu0 0.0
    %189 = vmatprep.subr.mxu0 0.0
    %190 = vmatpush1.xpose.msra.mxu0 0.0
    %191 = vmatprep.subr.mxu0 0.0
    %192 = vmatpush1.xpose.msra.mxu0 0.0
    %193 = vmatprep.subr.mxu0 0.0
    %194 = vmatpush1.xpose.msra.mxu0 0.0
    %195 = vmatprep.subr.mxu0 0.0
    %196 = vmatpush1.xpose.msra.mxu0 0.0
    %197 = vmatprep.subr.mxu0 0.0
    %198 = vmatpush1.xpose.msra.mxu0 0.0
    %199 = vmatprep.subr.mxu0 0.0
    %200 = vmatpush1.xpose.msra.mxu0 0.0
    %201 = vmatprep.subr.mxu0 0.0
    %202 = vmatpush1.xpose.msra.mxu0 0.0
    %203 = vmatprep.subr.mxu0 0.0
    %204 = vmatpush1.xpose.msra.mxu0 0.0
    %205 = vmatprep.subr.mxu0 0.0
    %206 = vmatpush1.xpose.msra.mxu0 0.0
    %207 = vmatprep.subr.mxu0 0.0
    %208 = vmatpush1.xpose.msra.mxu0 0.0
    %209 = vmatprep.subr.mxu0 0.0
    %210 = vmatpush1.xpose.msra.mxu0 0.0
    %211 = vmatprep.subr.mxu0 0.0
    %212 = vmatpush1.xpose.msra.mxu0 0.0
    %213 = vmatprep.subr.mxu0 0.0
    %214 = vmatpush1.xpose.msra.mxu0 %v183
    %215 = vmatprep.subr.mxu0 0.0
    %216 = vmatpush1.xpose.msra.mxu0 %v181
    %217 = vmatprep.subr.mxu0 0.0
    %218 = vmatpush2.xpose.msra.mxu0 0.0
    %219 = vmatprep.subr.mxu0 0.0
    %220 = vmatpush2.xpose.msra.mxu0 0.0
    %221 = vmatprep.subr.mxu0 0.0
    %222 = vmatpush2.xpose.msra.mxu0 0.0
    %223 = vmatprep.subr.mxu0 0.0
    %224 = vmatpush2.xpose.msra.mxu0 0.0
    %225 = vmatprep.subr.mxu0 0.0
    %226 = vmatpush2.xpose.msra.mxu0 0.0
    %227 = vmatprep.subr.mxu0 0.0
    %228 = vmatpush2.xpose.msra.mxu0 0.0
    %229 = vmatprep.subr.mxu0 0.0
    %230 = vmatpush2.xpose.msra.mxu0 0.0
    %231 = vmatprep.subr.mxu0 0.0
    %232 = vmatpush2.xpose.msra.mxu0 0.0
    %233 = vmatprep.subr.mxu0 0.0
    %234 = vmatpush2.xpose.msra.mxu0 0.0
    %235 = vmatprep.subr.mxu0 0.0
    %236 = vmatpush2.xpose.msra.mxu0 0.0
    %237 = vmatprep.subr.mxu0 0.0
    %238 = vmatpush2.xpose.msra.mxu0 0.0
    %239 = vmatprep.subr.mxu0 0.0
    %240 = vmatpush2.xpose.msra.mxu0 0.0
    %241 = vmatprep.subr.mxu0 0.0
    %242 = vmatpush2.xpose.msra.mxu0 0.0
    %243 = vmatprep.subr.mxu0 0.0
    %244 = vmatpush2.xpose.msra.mxu0 0.0
    %245 = vmatprep.subr.mxu0 0.0
    %246 = vmatpush2.xpose.msra.mxu0 0.0
    %247 = vmatprep.subr.mxu0 0.0
    %248 = vmatpush2.xpose.msra.mxu0 0.0
    %249 = vmatprep.mubr.f32.mxu0 0.0
    %250 = vmatmul.mubr.f32.gmra.mxu0 %v177
    %v251 = vpop.f32.mrf.mxu0
    %v252 = vadd.f32 %v70, %v251
    %v253 = vpop.f32.mrf.mxu0
    %254 = vmatprep.mubr.f32.mxu0 0.0
    %255 = vmatmul.mubr.f32.gmra.mxu0 %v179
    %v256 = vpop.f32.mrf.mxu0
    %v257 = vadd.f32 %v71, %v256
    %v258 = vpop.f32.mrf.mxu0
    %259 = vdwg.mxu0
    %260 = vrot.lane.b32.xlu0 %v161, 96
    %v261 = vpop.permute.xlu0 %260
    %262 = vrot.lane.b32.xlu0 %v163, 96
    %v263 = vpop.permute.xlu0 %262
    %v264 = vsel %vm176, %v161, 0
    %v266 = vsel %vm176, %v163, 0
    %v268 = vsel %vm176, %v261, 0
    %v270 = vsel %vm176, %v263, 0
    %272 = vmatprep.subr.mxu0 0.0
    %273 = vmatpush1.xpose.msra.mxu0 0.0
    %274 = vmatprep.subr.mxu0 0.0
    %275 = vmatpush1.xpose.msra.mxu0 0.0
    %276 = vmatprep.subr.mxu0 0.0
    %277 = vmatpush1.xpose.msra.mxu0 0.0
    %278 = vmatprep.subr.mxu0 0.0
    %279 = vmatpush1.xpose.msra.mxu0 0.0
    %280 = vmatprep.subr.mxu0 0.0
    %281 = vmatpush1.xpose.msra.mxu0 0.0
    %282 = vmatprep.subr.mxu0 0.0
    %283 = vmatpush1.xpose.msra.mxu0 0.0
    %284 = vmatprep.subr.mxu0 0.0
    %285 = vmatpush1.xpose.msra.mxu0 0.0
    %286 = vmatprep.subr.mxu0 0.0
    %287 = vmatpush1.xpose.msra.mxu0 0.0
    %288 = vmatprep.subr.mxu0 0.0
    %289 = vmatpush1.xpose.msra.mxu0 0.0
    %290 = vmatprep.subr.mxu0 0.0
    %291 = vmatpush1.xpose.msra.mxu0 0.0
    %292 = vmatprep.subr.mxu0 0.0
    %293 = vmatpush1.xpose.msra.mxu0 0.0
    %294 = vmatprep.subr.mxu0 0.0
    %295 = vmatpush1.xpose.msra.mxu0 0.0
    %296 = vmatprep.subr.mxu0 0.0
    %297 = vmatpush1.xpose.msra.mxu0 0.0
    %298 = vmatprep.subr.mxu0 0.0
    %299 = vmatpush1.xpose.msra.mxu0 0.0
    %300 = vmatprep.subr.mxu0 0.0
    %301 = vmatpush1.xpose.msra.mxu0 %v270
    %302 = vmatprep.subr.mxu0 0.0
    %303 = vmatpush1.xpose.msra.mxu0 %v268
    %304 = vmatprep.subr.mxu0 0.0
    %305 = vmatpush2.xpose.msra.mxu0 0.0
    %306 = vmatprep.subr.mxu0 0.0
    %307 = vmatpush2.xpose.msra.mxu0 0.0
    %308 = vmatprep.subr.mxu0 0.0
    %309 = vmatpush2.xpose.msra.mxu0 0.0
    %310 = vmatprep.subr.mxu0 0.0
    %311 = vmatpush2.xpose.msra.mxu0 0.0
    %312 = vmatprep.subr.mxu0 0.0
    %313 = vmatpush2.xpose.msra.mxu0 0.0
    %314 = vmatprep.subr.mxu0 0.0
    %315 = vmatpush2.xpose.msra.mxu0 0.0
    %316 = vmatprep.subr.mxu0 0.0
    %317 = vmatpush2.xpose.msra.mxu0 0.0
    %318 = vmatprep.subr.mxu0 0.0
    %319 = vmatpush2.xpose.msra.mxu0 0.0
    %320 = vmatprep.subr.mxu0 0.0
    %321 = vmatpush2.xpose.msra.mxu0 0.0
    %322 = vmatprep.subr.mxu0 0.0
    %323 = vmatpush2.xpose.msra.mxu0 0.0
    %324 = vmatprep.subr.mxu0 0.0
    %325 = vmatpush2.xpose.msra.mxu0 0.0
    %326 = vmatprep.subr.mxu0 0.0
    %327 = vmatpush2.xpose.msra.mxu0 0.0
    %328 = vmatprep.subr.mxu0 0.0
    %329 = vmatpush2.xpose.msra.mxu0 0.0
    %330 = vmatprep.subr.mxu0 0.0
    %331 = vmatpush2.xpose.msra.mxu0 0.0
    %332 = vmatprep.subr.mxu0 0.0
    %333 = vmatpush2.xpose.msra.mxu0 0.0
    %334 = vmatprep.subr.mxu0 0.0
    %335 = vmatpush2.xpose.msra.mxu0 0.0
    %336 = vmatprep.mubr.f32.mxu0 0.0
    %337 = vmatmul.mubr.f32.gmra.mxu0 %v264
    %v338 = vpop.f32.mrf.mxu0
    %v339 = vadd.f32 %v70, %v338
    %v340 = vpop.f32.mrf.mxu0
    %341 = vmatprep.mubr.f32.mxu0 0.0
    %342 = vmatmul.mubr.f32.gmra.mxu0 %v266
    %v343 = vpop.f32.mrf.mxu0
    %v344 = vadd.f32 %v71, %v343
    %v345 = vpop.f32.mrf.mxu0
    %346 = vdwg.mxu0
    %347 = vrot.lane.b32.xlu0 %v165, 96
    %v348 = vpop.permute.xlu0 %347
    %349 = vrot.lane.b32.xlu0 %v167, 96
    %v350 = vpop.permute.xlu0 %349
    %v351 = vsel %vm176, %v165, 0
    %v353 = vsel %vm176, %v167, 0
    %v355 = vsel %vm176, %v348, 0
    %v357 = vsel %vm176, %v350, 0
    %359 = vmatprep.subr.mxu0 0.0
    %360 = vmatpush1.xpose.msra.mxu0 0.0
    %361 = vmatprep.subr.mxu0 0.0
    %362 = vmatpush1.xpose.msra.mxu0 0.0
    %363 = vmatprep.subr.mxu0 0.0
    %364 = vmatpush1.xpose.msra.mxu0 0.0
    %365 = vmatprep.subr.mxu0 0.0
    %366 = vmatpush1.xpose.msra.mxu0 0.0
    %367 = vmatprep.subr.mxu0 0.0
    %368 = vmatpush1.xpose.msra.mxu0 0.0
    %369 = vmatprep.subr.mxu0 0.0
    %370 = vmatpush1.xpose.msra.mxu0 0.0
    %371 = vmatprep.subr.mxu0 0.0
    %372 = vmatpush1.xpose.msra.mxu0 0.0
    %373 = vmatprep.subr.mxu0 0.0
    %374 = vmatpush1.xpose.msra.mxu0 0.0
    %375 = vmatprep.subr.mxu0 0.0
    %376 = vmatpush1.xpose.msra.mxu0 0.0
    %377 = vmatprep.subr.mxu0 0.0
    %378 = vmatpush1.xpose.msra.mxu0 0.0
    %379 = vmatprep.subr.mxu0 0.0
    %380 = vmatpush1.xpose.msra.mxu0 0.0
    %381 = vmatprep.subr.mxu0 0.0
    %382 = vmatpush1.xpose.msra.mxu0 0.0
    %383 = vmatprep.subr.mxu0 0.0
    %384 = vmatpush1.xpose.msra.mxu0 0.0
    %385 = vmatprep.subr.mxu0 0.0
    %386 = vmatpush1.xpose.msra.mxu0 0.0
    %387 = vmatprep.subr.mxu0 0.0
    %388 = vmatpush1.xpose.msra.mxu0 %v357
    %389 = vmatprep.subr.mxu0 0.0
    %390 = vmatpush1.xpose.msra.mxu0 %v355
    %391 = vmatprep.subr.mxu0 0.0
    %392 = vmatpush2.xpose.msra.mxu0 0.0
    %393 = vmatprep.subr.mxu0 0.0
    %394 = vmatpush2.xpose.msra.mxu0 0.0
    %395 = vmatprep.subr.mxu0 0.0
    %396 = vmatpush2.xpose.msra.mxu0 0.0
    %397 = vmatprep.subr.mxu0 0.0
    %398 = vmatpush2.xpose.msra.mxu0 0.0
    %399 = vmatprep.subr.mxu0 0.0
    %400 = vmatpush2.xpose.msra.mxu0 0.0
    %401 = vmatprep.subr.mxu0 0.0
    %402 = vmatpush2.xpose.msra.mxu0 0.0
    %403 = vmatprep.subr.mxu0 0.0
    %404 = vmatpush2.xpose.msra.mxu0 0.0
    %405 = vmatprep.subr.mxu0 0.0
    %406 = vmatpush2.xpose.msra.mxu0 0.0
    %407 = vmatprep.subr.mxu0 0.0
    %408 = vmatpush2.xpose.msra.mxu0 0.0
    %409 = vmatprep.subr.mxu0 0.0
    %410 = vmatpush2.xpose.msra.mxu0 0.0
    %411 = vmatprep.subr.mxu0 0.0
    %412 = vmatpush2.xpose.msra.mxu0 0.0
    %413 = vmatprep.subr.mxu0 0.0
    %414 = vmatpush2.xpose.msra.mxu0 0.0
    %415 = vmatprep.subr.mxu0 0.0
    %416 = vmatpush2.xpose.msra.mxu0 0.0
    %417 = vmatprep.subr.mxu0 0.0
    %418 = vmatpush2.xpose.msra.mxu0 0.0
    %419 = vmatprep.subr.mxu0 0.0
    %420 = vmatpush2.xpose.msra.mxu0 0.0
    %421 = vmatprep.subr.mxu0 0.0
    %422 = vmatpush2.xpose.msra.mxu0 0.0
    %423 = vmatprep.mubr.f32.mxu0 0.0
    %424 = vmatmul.mubr.f32.gmra.mxu0 %v351
    %v425 = vpop.f32.mrf.mxu0
    %v426 = vadd.f32 %v70, %v425
    %v427 = vpop.f32.mrf.mxu0
    %428 = vmatprep.mubr.f32.mxu0 0.0
    %429 = vmatmul.mubr.f32.gmra.mxu0 %v353
    %v430 = vpop.f32.mrf.mxu0
    %v431 = vadd.f32 %v71, %v430
    %v432 = vpop.f32.mrf.mxu0
    %433 = vdwg.mxu0
    %434 = vrot.lane.b32.xlu0 %v169, 96
    %v435 = vpop.permute.xlu0 %434
    %436 = vrot.lane.b32.xlu0 %v171, 96
    %v437 = vpop.permute.xlu0 %436
    %v438 = vsel %vm176, %v169, 0
    %v440 = vsel %vm176, %v171, 0
    %v442 = vsel %vm176, %v435, 0
    %v444 = vsel %vm176, %v437, 0
    %446 = vmatprep.subr.mxu0 0.0
    %447 = vmatpush1.xpose.msra.mxu0 0.0
    %448 = vmatprep.subr.mxu0 0.0
    %449 = vmatpush1.xpose.msra.mxu0 0.0
    %450 = vmatprep.subr.mxu0 0.0
    %451 = vmatpush1.xpose.msra.mxu0 0.0
    %452 = vmatprep.subr.mxu0 0.0
    %453 = vmatpush1.xpose.msra.mxu0 0.0
    %454 = vmatprep.subr.mxu0 0.0
    %455 = vmatpush1.xpose.msra.mxu0 0.0
    %456 = vmatprep.subr.mxu0 0.0
    %457 = vmatpush1.xpose.msra.mxu0 0.0
    %458 = vmatprep.subr.mxu0 0.0
    %459 = vmatpush1.xpose.msra.mxu0 0.0
    %460 = vmatprep.subr.mxu0 0.0
    %461 = vmatpush1.xpose.msra.mxu0 0.0
    %462 = vmatprep.subr.mxu0 0.0
    %463 = vmatpush1.xpose.msra.mxu0 0.0
    %464 = vmatprep.subr.mxu0 0.0
    %465 = vmatpush1.xpose.msra.mxu0 0.0
    %466 = vmatprep.subr.mxu0 0.0
    %467 = vmatpush1.xpose.msra.mxu0 0.0
    %468 = vmatprep.subr.mxu0 0.0
    %469 = vmatpush1.xpose.msra.mxu0 0.0
    %470 = vmatprep.subr.mxu0 0.0
    %471 = vmatpush1.xpose.msra.mxu0 0.0
    %472 = vmatprep.subr.mxu0 0.0
    %473 = vmatpush1.xpose.msra.mxu0 0.0
    %474 = vmatprep.subr.mxu0 0.0
    %475 = vmatpush1.xpose.msra.mxu0 %v444
    %476 = vmatprep.subr.mxu0 0.0
    %477 = vmatpush1.xpose.msra.mxu0 %v442
    %478 = vmatprep.subr.mxu0 0.0
    %479 = vmatpush2.xpose.msra.mxu0 0.0
    %480 = vmatprep.subr.mxu0 0.0
    %481 = vmatpush2.xpose.msra.mxu0 0.0
    %482 = vmatprep.subr.mxu0 0.0
    %483 = vmatpush2.xpose.msra.mxu0 0.0
    %484 = vmatprep.subr.mxu0 0.0
    %485 = vmatpush2.xpose.msra.mxu0 0.0
    %486 = vmatprep.subr.mxu0 0.0
    %487 = vmatpush2.xpose.msra.mxu0 0.0
    %488 = vmatprep.subr.mxu0 0.0
    %489 = vmatpush2.xpose.msra.mxu0 0.0
    %490 = vmatprep.subr.mxu0 0.0
    %491 = vmatpush2.xpose.msra.mxu0 0.0
    %492 = vmatprep.subr.mxu0 0.0
    %493 = vmatpush2.xpose.msra.mxu0 0.0
    %494 = vmatprep.subr.mxu0 0.0
    %495 = vmatpush2.xpose.msra.mxu0 0.0
    %496 = vmatprep.subr.mxu0 0.0
    %497 = vmatpush2.xpose.msra.mxu0 0.0
    %498 = vmatprep.subr.mxu0 0.0
    %499 = vmatpush2.xpose.msra.mxu0 0.0
    %500 = vmatprep.subr.mxu0 0.0
    %501 = vmatpush2.xpose.msra.mxu0 0.0
    %502 = vmatprep.subr.mxu0 0.0
    %503 = vmatpush2.xpose.msra.mxu0 0.0
    %504 = vmatprep.subr.mxu0 0.0
    %505 = vmatpush2.xpose.msra.mxu0 0.0
    %506 = vmatprep.subr.mxu0 0.0
    %507 = vmatpush2.xpose.msra.mxu0 0.0
    %508 = vmatprep.subr.mxu0 0.0
    %509 = vmatpush2.xpose.msra.mxu0 0.0
    %510 = vmatprep.mubr.f32.mxu0 0.0
    %511 = vmatmul.mubr.f32.gmra.mxu0 %v438
    %v512 = vpop.f32.mrf.mxu0
    %v513 = vadd.f32 %v70, %v512
    %v514 = vpop.f32.mrf.mxu0
    %515 = vmatprep.mubr.f32.mxu0 0.0
    %516 = vmatmul.mubr.f32.gmra.mxu0 %v440
    %v517 = vpop.f32.mrf.mxu0
    %v518 = vadd.f32 %v71, %v517
    %v519 = vpop.f32.mrf.mxu0
    %520 = vdwg.mxu0
    %vm521 = vcmask 130048
    %v522 = vsel %vm521, %v252, -inf
    %523 = vmax.xlane.f32.xlu0 %v522
    %v524 = vpop.xlane.xlu0 %523
    %v525 = vsel %vm521, %v257, -inf
    %526 = vmax.xlane.f32.xlu0 %v525
    %v527 = vpop.xlane.xlu0 %526
    %v528 = vsel %vm521, %v339, -inf
    %529 = vmax.xlane.f32.xlu0 %v528
    %v530 = vpop.xlane.xlu0 %529
    %v531 = vsel %vm521, %v344, -inf
    %532 = vmax.xlane.f32.xlu0 %v531
    %v533 = vpop.xlane.xlu0 %532
    %v534 = vsel %vm521, %v426, -inf
    %535 = vmax.xlane.f32.xlu0 %v534
    %v536 = vpop.xlane.xlu0 %535
    %v537 = vsel %vm521, %v431, -inf
    %538 = vmax.xlane.f32.xlu0 %v537
    %v539 = vpop.xlane.xlu0 %538
    %v540 = vsel %vm521, %v513, -inf
    %541 = vmax.xlane.f32.xlu0 %v540
    %v542 = vpop.xlane.xlu0 %541
    %v543 = vsel %vm521, %v518, -inf
    %544 = vmax.xlane.f32.xlu0 %v543
    %v545 = vpop.xlane.xlu0 %544
    %v546 = vsub.f32 %v252, %v524
    %v547 = vsub.f32 %v257, %v527
    %v548 = vsub.f32 %v339, %v530
    %v549 = vsub.f32 %v344, %v533
    %v550 = vsub.f32 %v426, %v536
    %v551 = vsub.f32 %v431, %v539
    %v552 = vsub.f32 %v513, %v542
    %v553 = vsub.f32 %v518, %v545
    %v554 = vmul.f32 %v546, 1.442695
    %v555 = vpow.pop %v554
    %v556 = vmul.f32 %v547, 1.442695
    %v557 = vpow.pop %v556
    %v558 = vmul.f32 %v548, 1.442695
    %v559 = vpow.pop %v558
    %v560 = vmul.f32 %v549, 1.442695
    %v561 = vpow.pop %v560
    %v562 = vmul.f32 %v550, 1.442695
    %v563 = vpow.pop %v562
    %v564 = vmul.f32 %v551, 1.442695
    %v565 = vpow.pop %v564
    %v566 = vmul.f32 %v552, 1.442695
    %v567 = vpow.pop %v566
    %v568 = vmul.f32 %v553, 1.442695
    %v569 = vpow.pop %v568
    %v570 = vsel %vm521, %v555, 0.0
    %571 = vadd.xlane.f32.xlu0 %v570
    %v572 = vpop.xlane.xlu0 %571
    %v573 = vsel %vm521, %v557, 0.0
    %574 = vadd.xlane.f32.xlu0 %v573
    %v575 = vpop.xlane.xlu0 %574
    %v576 = vsel %vm521, %v559, 0.0
    %577 = vadd.xlane.f32.xlu0 %v576
    %v578 = vpop.xlane.xlu0 %577
    %v579 = vsel %vm521, %v561, 0.0
    %580 = vadd.xlane.f32.xlu0 %v579
    %v581 = vpop.xlane.xlu0 %580
    %v582 = vsel %vm521, %v563, 0.0
    %583 = vadd.xlane.f32.xlu0 %v582
    %v584 = vpop.xlane.xlu0 %583
    %v585 = vsel %vm521, %v565, 0.0
    %586 = vadd.xlane.f32.xlu0 %v585
    %v587 = vpop.xlane.xlu0 %586
    %v588 = vsel %vm521, %v567, 0.0
    %589 = vadd.xlane.f32.xlu0 %v588
    %v590 = vpop.xlane.xlu0 %589
    %v591 = vsel %vm521, %v569, 0.0
    %592 = vadd.xlane.f32.xlu0 %v591
    %v593 = vpop.xlane.xlu0 %592
    %v594 = vrcp.pop %v572
    %v595 = vrcp.pop %v575
    %v596 = vrcp.pop %v578
    %v597 = vrcp.pop %v581
    %v598 = vrcp.pop %v584
    %v599 = vrcp.pop %v587
    %v600 = vrcp.pop %v590
    %v601 = vrcp.pop %v593
    %v602 = vmul.f32 %v555, %v594
    %v603 = vmul.f32 %v557, %v595
    %v604 = vmul.f32 %v559, %v596
    %v605 = vmul.f32 %v561, %v597
    %v606 = vmul.f32 %v563, %v598
    %v607 = vmul.f32 %v565, %v599
    %v608 = vmul.f32 %v567, %v600
    %v609 = vmul.f32 %v569, %v601
    %610 = vrot.lane.b32.xlu0 %v150, 64
    %v611 = vpop.permute.xlu0 %610
    %612 = vrot.lane.b32.xlu0 %v155, 64
    %v613 = vpop.permute.xlu0 %612
    %v617 = vsel %vm521, %v602, 0
    %v620 = vsel %vm521, %v603, 0
    %622 = vmatprep.subr.mxu0 0.0
    %623 = vmatpush1.msra.mxu0 0.0
    %624 = vmatprep.subr.mxu0 0.0
    %625 = vmatpush1.msra.mxu0 0.0
    %626 = vmatprep.subr.mxu0 0.0
    %627 = vmatpush1.msra.mxu0 0.0
    %628 = vmatprep.subr.mxu0 0.0
    %629 = vmatpush1.msra.mxu0 0.0
    %630 = vmatprep.subr.mxu0 0.0
    %631 = vmatpush1.msra.mxu0 0.0
    %632 = vmatprep.subr.mxu0 0.0
    %633 = vmatpush1.msra.mxu0 0.0
    %634 = vmatprep.subr.mxu0 0.0
    %635 = vmatpush1.msra.mxu0 0.0
    %636 = vmatprep.subr.mxu0 0.0
    %637 = vmatpush1.msra.mxu0 0.0
    %638 = vmatprep.subr.mxu0 0.0
    %639 = vmatpush1.msra.mxu0 0.0
    %640 = vmatprep.subr.mxu0 0.0
    %641 = vmatpush1.msra.mxu0 0.0
    %642 = vmatprep.subr.mxu0 0.0
    %643 = vmatpush1.msra.mxu0 0.0
    %644 = vmatprep.subr.mxu0 0.0
    %645 = vmatpush1.msra.mxu0 0.0
    %646 = vmatprep.subr.mxu0 0.0
    %647 = vmatpush1.msra.mxu0 0.0
    %648 = vmatprep.subr.mxu0 0.0
    %649 = vmatpush1.msra.mxu0 0.0
    %650 = vmatprep.subr.mxu0 0.0
    %651 = vmatpush1.msra.mxu0 %v613
    %652 = vmatprep.subr.mxu0 0.0
    %653 = vmatpush1.msra.mxu0 %v611
    %654 = vmatprep.subr.mxu0 0.0
    %655 = vmatpush2.msra.mxu0 0.0
    %656 = vmatprep.subr.mxu0 0.0
    %657 = vmatpush2.msra.mxu0 0.0
    %658 = vmatprep.subr.mxu0 0.0
    %659 = vmatpush2.msra.mxu0 0.0
    %660 = vmatprep.subr.mxu0 0.0
    %661 = vmatpush2.msra.mxu0 0.0
    %662 = vmatprep.subr.mxu0 0.0
    %663 = vmatpush2.msra.mxu0 0.0
    %664 = vmatprep.subr.mxu0 0.0
    %665 = vmatpush2.msra.mxu0 0.0
    %666 = vmatprep.subr.mxu0 0.0
    %667 = vmatpush2.msra.mxu0 0.0
    %668 = vmatprep.subr.mxu0 0.0
    %669 = vmatpush2.msra.mxu0 0.0
    %670 = vmatprep.subr.mxu0 0.0
    %671 = vmatpush2.msra.mxu0 0.0
    %672 = vmatprep.subr.mxu0 0.0
    %673 = vmatpush2.msra.mxu0 0.0
    %674 = vmatprep.subr.mxu0 0.0
    %675 = vmatpush2.msra.mxu0 0.0
    %676 = vmatprep.subr.mxu0 0.0
    %677 = vmatpush2.msra.mxu0 0.0
    %678 = vmatprep.subr.mxu0 0.0
    %679 = vmatpush2.msra.mxu0 0.0
    %680 = vmatprep.subr.mxu0 0.0
    %681 = vmatpush2.msra.mxu0 0.0
    %682 = vmatprep.subr.mxu0 0.0
    %683 = vmatpush2.msra.mxu0 0.0
    %684 = vmatprep.subr.mxu0 0.0
    %685 = vmatpush2.msra.mxu0 0.0
    %686 = vmatprep.mubr.f32.mxu0 0.0
    %687 = vmatmul.mubr.f32.gmra.mxu0 %v617
    %v688 = vpop.f32.mrf.mxu0
    %v689 = vadd.f32 0.0, %v688
    %v690 = vpop.f32.mrf.mxu0
    %691 = vmatprep.mubr.f32.mxu0 0.0
    %692 = vmatmul.mubr.f32.gmra.mxu0 %v620
    %v693 = vpop.f32.mrf.mxu0
    %v694 = vadd.f32 0.0, %v693
    %v695 = vpop.f32.mrf.mxu0
    %696 = vdwg.mxu0
    %697 = vrot.lane.b32.xlu0 %v161, 64
    %v698 = vpop.permute.xlu0 %697
    %699 = vrot.lane.b32.xlu0 %v163, 64
    %v700 = vpop.permute.xlu0 %699
    %v704 = vsel %vm521, %v604, 0
    %v707 = vsel %vm521, %v605, 0
    %709 = vmatprep.subr.mxu0 0.0
    %710 = vmatpush1.msra.mxu0 0.0
    %711 = vmatprep.subr.mxu0 0.0
    %712 = vmatpush1.msra.mxu0 0.0
    %713 = vmatprep.subr.mxu0 0.0
    %714 = vmatpush1.msra.mxu0 0.0
    %715 = vmatprep.subr.mxu0 0.0
    %716 = vmatpush1.msra.mxu0 0.0
    %717 = vmatprep.subr.mxu0 0.0
    %718 = vmatpush1.msra.mxu0 0.0
    %719 = vmatprep.subr.mxu0 0.0
    %720 = vmatpush1.msra.mxu0 0.0
    %721 = vmatprep.subr.mxu0 0.0
    %722 = vmatpush1.msra.mxu0 0.0
    %723 = vmatprep.subr.mxu0 0.0
    %724 = vmatpush1.msra.mxu0 0.0
    %725 = vmatprep.subr.mxu0 0.0
    %726 = vmatpush1.msra.mxu0 0.0
    %727 = vmatprep.subr.mxu0 0.0
    %728 = vmatpush1.msra.mxu0 0.0
    %729 = vmatprep.subr.mxu0 0.0
    %730 = vmatpush1.msra.mxu0 0.0
    %731 = vmatprep.subr.mxu0 0.0
    %732 = vmatpush1.msra.mxu0 0.0
    %733 = vmatprep.subr.mxu0 0.0
    %734 = vmatpush1.msra.mxu0 0.0
    %735 = vmatprep.subr.mxu0 0.0
    %736 = vmatpush1.msra.mxu0 0.0
    %737 = vmatprep.subr.mxu0 0.0
    %738 = vmatpush1.msra.mxu0 %v700
    %739 = vmatprep.subr.mxu0 0.0
    %740 = vmatpush1.msra.mxu0 %v698
    %741 = vmatprep.subr.mxu0 0.0
    %742 = vmatpush2.msra.mxu0 0.0
    %743 = vmatprep.subr.mxu0 0.0
    %744 = vmatpush2.msra.mxu0 0.0
    %745 = vmatprep.subr.mxu0 0.0
    %746 = vmatpush2.msra.mxu0 0.0
    %747 = vmatprep.subr.mxu0 0.0
    %748 = vmatpush2.msra.mxu0 0.0
    %749 = vmatprep.subr.mxu0 0.0
    %750 = vmatpush2.msra.mxu0 0.0
    %751 = vmatprep.subr.mxu0 0.0
    %752 = vmatpush2.msra.mxu0 0.0
    %753 = vmatprep.subr.mxu0 0.0
    %754 = vmatpush2.msra.mxu0 0.0
    %755 = vmatprep.subr.mxu0 0.0
    %756 = vmatpush2.msra.mxu0 0.0
    %757 = vmatprep.subr.mxu0 0.0
    %758 = vmatpush2.msra.mxu0 0.0
    %759 = vmatprep.subr.mxu0 0.0
    %760 = vmatpush2.msra.mxu0 0.0
    %761 = vmatprep.subr.mxu0 0.0
    %762 = vmatpush2.msra.mxu0 0.0
    %763 = vmatprep.subr.mxu0 0.0
    %764 = vmatpush2.msra.mxu0 0.0
    %765 = vmatprep.subr.mxu0 0.0
    %766 = vmatpush2.msra.mxu0 0.0
    %767 = vmatprep.subr.mxu0 0.0
    %768 = vmatpush2.msra.mxu0 0.0
    %769 = vmatprep.subr.mxu0 0.0
    %770 = vmatpush2.msra.mxu0 0.0
    %771 = vmatprep.subr.mxu0 0.0
    %772 = vmatpush2.msra.mxu0 0.0
    %773 = vmatprep.mubr.f32.mxu0 0.0
    %774 = vmatmul.mubr.f32.gmra.mxu0 %v704
    %v775 = vpop.f32.mrf.mxu0
    %v776 = vadd.f32 0.0, %v775
    %v777 = vpop.f32.mrf.mxu0
    %778 = vmatprep.mubr.f32.mxu0 0.0
    %779 = vmatmul.mubr.f32.gmra.mxu0 %v707
    %v780 = vpop.f32.mrf.mxu0
    %v781 = vadd.f32 0.0, %v780
    %v782 = vpop.f32.mrf.mxu0
    %783 = vdwg.mxu0
    %784 = vrot.lane.b32.xlu0 %v165, 64
    %v785 = vpop.permute.xlu0 %784
    %786 = vrot.lane.b32.xlu0 %v167, 64
    %v787 = vpop.permute.xlu0 %786
    %v791 = vsel %vm521, %v606, 0
    %v794 = vsel %vm521, %v607, 0
    %796 = vmatprep.subr.mxu0 0.0
    %797 = vmatpush1.msra.mxu0 0.0
    %798 = vmatprep.subr.mxu0 0.0
    %799 = vmatpush1.msra.mxu0 0.0
    %800 = vmatprep.subr.mxu0 0.0
    %801 = vmatpush1.msra.mxu0 0.0
    %802 = vmatprep.subr.mxu0 0.0
    %803 = vmatpush1.msra.mxu0 0.0
    %804 = vmatprep.subr.mxu0 0.0
    %805 = vmatpush1.msra.mxu0 0.0
    %806 = vmatprep.subr.mxu0 0.0
    %807 = vmatpush1.msra.mxu0 0.0
    %808 = vmatprep.subr.mxu0 0.0
    %809 = vmatpush1.msra.mxu0 0.0
    %810 = vmatprep.subr.mxu0 0.0
    %811 = vmatpush1.msra.mxu0 0.0
    %812 = vmatprep.subr.mxu0 0.0
    %813 = vmatpush1.msra.mxu0 0.0
    %814 = vmatprep.subr.mxu0 0.0
    %815 = vmatpush1.msra.mxu0 0.0
    %816 = vmatprep.subr.mxu0 0.0
    %817 = vmatpush1.msra.mxu0 0.0
    %818 = vmatprep.subr.mxu0 0.0
    %819 = vmatpush1.msra.mxu0 0.0
    %820 = vmatprep.subr.mxu0 0.0
    %821 = vmatpush1.msra.mxu0 0.0
    %822 = vmatprep.subr.mxu0 0.0
    %823 = vmatpush1.msra.mxu0 0.0
    %824 = vmatprep.subr.mxu0 0.0
    %825 = vmatpush1.msra.mxu0 %v787
    %826 = vmatprep.subr.mxu0 0.0
    %827 = vmatpush1.msra.mxu0 %v785
    %828 = vmatprep.subr.mxu0 0.0
    %829 = vmatpush2.msra.mxu0 0.0
    %830 = vmatprep.subr.mxu0 0.0
    %831 = vmatpush2.msra.mxu0 0.0
    %832 = vmatprep.subr.mxu0 0.0
    %833 = vmatpush2.msra.mxu0 0.0
    %834 = vmatprep.subr.mxu0 0.0
    %835 = vmatpush2.msra.mxu0 0.0
    %836 = vmatprep.subr.mxu0 0.0
    %837 = vmatpush2.msra.mxu0 0.0
    %838 = vmatprep.subr.mxu0 0.0
    %839 = vmatpush2.msra.mxu0 0.0
    %840 = vmatprep.subr.mxu0 0.0
    %841 = vmatpush2.msra.mxu0 0.0
    %842 = vmatprep.subr.mxu0 0.0
    %843 = vmatpush2.msra.mxu0 0.0
    %844 = vmatprep.subr.mxu0 0.0
    %845 = vmatpush2.msra.mxu0 0.0
    %846 = vmatprep.subr.mxu0 0.0
    %847 = vmatpush2.msra.mxu0 0.0
    %848 = vmatprep.subr.mxu0 0.0
    %849 = vmatpush2.msra.mxu0 0.0
    %850 = vmatprep.subr.mxu0 0.0
    %851 = vmatpush2.msra.mxu0 0.0
    %852 = vmatprep.subr.mxu0 0.0
    %853 = vmatpush2.msra.mxu0 0.0
    %854 = vmatprep.subr.mxu0 0.0
    %855 = vmatpush2.msra.mxu0 0.0
    %856 = vmatprep.subr.mxu0 0.0
    %857 = vmatpush2.msra.mxu0 0.0
    %858 = vmatprep.subr.mxu0 0.0
    %859 = vmatpush2.msra.mxu0 0.0
    %860 = vmatprep.mubr.f32.mxu0 0.0
    %861 = vmatmul.mubr.f32.gmra.mxu0 %v791
    %v862 = vpop.f32.mrf.mxu0
    %v863 = vadd.f32 0.0, %v862
    %v864 = vpop.f32.mrf.mxu0
    %865 = vmatprep.mubr.f32.mxu0 0.0
    %866 = vmatmul.mubr.f32.gmra.mxu0 %v794
    %v867 = vpop.f32.mrf.mxu0
    %v868 = vadd.f32 0.0, %v867
    %v869 = vpop.f32.mrf.mxu0
    %870 = vdwg.mxu0
    %871 = vrot.lane.b32.xlu0 %v169, 64
    %v872 = vpop.permute.xlu0 %871
    %873 = vrot.lane.b32.xlu0 %v171, 64
    %v874 = vpop.permute.xlu0 %873
    %v878 = vsel %vm521, %v608, 0
    %v881 = vsel %vm521, %v609, 0
    %883 = vmatprep.subr.mxu0 0.0
    %884 = vmatpush1.msra.mxu0 0.0
    %885 = vmatprep.subr.mxu0 0.0
    %886 = vmatpush1.msra.mxu0 0.0
    %887 = vmatprep.subr.mxu0 0.0
    %888 = vmatpush1.msra.mxu0 0.0
    %889 = vmatprep.subr.mxu0 0.0
    %890 = vmatpush1.msra.mxu0 0.0
    %891 = vmatprep.subr.mxu0 0.0
    %892 = vmatpush1.msra.mxu0 0.0
    %893 = vmatprep.subr.mxu0 0.0
    %894 = vmatpush1.msra.mxu0 0.0
    %895 = vmatprep.subr.mxu0 0.0
    %896 = vmatpush1.msra.mxu0 0.0
    %897 = vmatprep.subr.mxu0 0.0
    %898 = vmatpush1.msra.mxu0 0.0
    %899 = vmatprep.subr.mxu0 0.0
    %900 = vmatpush1.msra.mxu0 0.0
    %901 = vmatprep.subr.mxu0 0.0
    %902 = vmatpush1.msra.mxu0 0.0
    %903 = vmatprep.subr.mxu0 0.0
    %904 = vmatpush1.msra.mxu0 0.0
    %905 = vmatprep.subr.mxu0 0.0
    %906 = vmatpush1.msra.mxu0 0.0
    %907 = vmatprep.subr.mxu0 0.0
    %908 = vmatpush1.msra.mxu0 0.0
    %909 = vmatprep.subr.mxu0 0.0
    %910 = vmatpush1.msra.mxu0 0.0
    %911 = vmatprep.subr.mxu0 0.0
    %912 = vmatpush1.msra.mxu0 %v874
    %913 = vmatprep.subr.mxu0 0.0
    %914 = vmatpush1.msra.mxu0 %v872
    %915 = vmatprep.subr.mxu0 0.0
    %916 = vmatpush2.msra.mxu0 0.0
    %917 = vmatprep.subr.mxu0 0.0
    %918 = vmatpush2.msra.mxu0 0.0
    %919 = vmatprep.subr.mxu0 0.0
    %920 = vmatpush2.msra.mxu0 0.0
    %921 = vmatprep.subr.mxu0 0.0
    %922 = vmatpush2.msra.mxu0 0.0
    %923 = vmatprep.subr.mxu0 0.0
    %924 = vmatpush2.msra.mxu0 0.0
    %925 = vmatprep.subr.mxu0 0.0
    %926 = vmatpush2.msra.mxu0 0.0
    %927 = vmatprep.subr.mxu0 0.0
    %928 = vmatpush2.msra.mxu0 0.0
    %929 = vmatprep.subr.mxu0 0.0
    %930 = vmatpush2.msra.mxu0 0.0
    %931 = vmatprep.subr.mxu0 0.0
    %932 = vmatpush2.msra.mxu0 0.0
    %933 = vmatprep.subr.mxu0 0.0
    %934 = vmatpush2.msra.mxu0 0.0
    %935 = vmatprep.subr.mxu0 0.0
    %936 = vmatpush2.msra.mxu0 0.0
    %937 = vmatprep.subr.mxu0 0.0
    %938 = vmatpush2.msra.mxu0 0.0
    %939 = vmatprep.subr.mxu0 0.0
    %940 = vmatpush2.msra.mxu0 0.0
    %941 = vmatprep.subr.mxu0 0.0
    %942 = vmatpush2.msra.mxu0 0.0
    %943 = vmatprep.subr.mxu0 0.0
    %944 = vmatpush2.msra.mxu0 0.0
    %945 = vmatprep.subr.mxu0 0.0
    %946 = vmatpush2.msra.mxu0 0.0
    %947 = vmatprep.mubr.f32.mxu0 0.0
    %948 = vmatmul.mubr.f32.gmra.mxu0 %v878
    %v949 = vpop.f32.mrf.mxu0
    %v950 = vadd.f32 0.0, %v949
    %v951 = vpop.f32.mrf.mxu0
    %952 = vmatprep.mubr.f32.mxu0 0.0
    %953 = vmatmul.mubr.f32.gmra.mxu0 %v881
    %v954 = vpop.f32.mrf.mxu0
    %v955 = vadd.f32 0.0, %v954
    %v956 = vpop.f32.mrf.mxu0
    %957 = vdwg.mxu0
    %960 = vrot.lane.b32.xlu0 %v776, 8
    %v961 = vpop.permute.xlu0 %960
    %962 = vrot.lane.b32.xlu0 %v781, 8
    %v963 = vpop.permute.xlu0 %962
    %968 = vrot.lane.b32.xlu0 %v863, 16
    %v969 = vpop.permute.xlu0 %968
    %970 = vrot.lane.b32.xlu0 %v868, 16
    %v971 = vpop.permute.xlu0 %970
    %976 = vrot.lane.b32.xlu0 %v950, 24
    %v977 = vpop.permute.xlu0 %976
    %978 = vrot.lane.b32.xlu0 %v955, 24
    %v979 = vpop.permute.xlu0 %978
    %v982 = vsel %vm176, %v689, %v961
    %v983 = vsel %vm176, %v694, %v963
    %v984 = vsel %vm521, %v982, %v969
    %v985 = vsel %vm521, %v983, %v971
    %vm986 = vcmask 195584
    %v987 = vsel %vm986, %v984, %v977
    %v988 = vsel %vm986, %v985, %v979
    %v989 = vlaneseq
    %v990 = vshrl.u32 %v989, 7
    %v991 = vsub.s32 0, %v990
    %v992 = vrot.slane %v63, %v991
    %v994 = vsel %vm76, %v987, 0
    %v997 = vsel %vm76, %v988, 0
    %999 = vmatprep.subr.mxu0 0.0
    %1000 = vmatpush1.msra.mxu0 0.0
    %1001 = vmatprep.subr.mxu0 0.0
    %1002 = vmatpush1.msra.mxu0 0.0
    %1003 = vmatprep.subr.mxu0 0.0
    %1004 = vmatpush1.msra.mxu0 0.0
    %1005 = vmatprep.subr.mxu0 0.0
    %1006 = vmatpush1.msra.mxu0 0.0
    %1007 = vmatprep.subr.mxu0 0.0
    %1008 = vmatpush1.msra.mxu0 0.0
    %1009 = vmatprep.subr.mxu0 0.0
    %1010 = vmatpush1.msra.mxu0 0.0
    %1011 = vmatprep.subr.mxu0 0.0
    %1012 = vmatpush1.msra.mxu0 0.0
    %1013 = vmatprep.subr.mxu0 0.0
    %1014 = vmatpush1.msra.mxu0 0.0
    %1015 = vmatprep.subr.mxu0 0.0
    %1016 = vmatpush1.msra.mxu0 0.0
    %1017 = vmatprep.subr.mxu0 0.0
    %1018 = vmatpush1.msra.mxu0 0.0
    %1019 = vmatprep.subr.mxu0 0.0
    %1020 = vmatpush1.msra.mxu0 0.0
    %1021 = vmatprep.subr.mxu0 0.0
    %1022 = vmatpush1.msra.mxu0 0.0
    %1023 = vmatprep.subr.mxu0 0.0
    %1024 = vmatpush1.msra.mxu0 %v49
    %1025 = vmatprep.subr.mxu0 0.0
    %1026 = vmatpush1.msra.mxu0 %v48
    %1027 = vmatprep.subr.mxu0 0.0
    %1028 = vmatpush1.msra.mxu0 %v47
    %1029 = vmatprep.subr.mxu0 0.0
    %1030 = vmatpush1.msra.mxu0 %v46
    %1031 = vmatprep.subr.mxu0 0.0
    %1032 = vmatpush2.msra.mxu0 0.0
    %1033 = vmatprep.subr.mxu0 0.0
    %1034 = vmatpush2.msra.mxu0 0.0
    %1035 = vmatprep.subr.mxu0 0.0
    %1036 = vmatpush2.msra.mxu0 0.0
    %1037 = vmatprep.subr.mxu0 0.0
    %1038 = vmatpush2.msra.mxu0 0.0
    %1039 = vmatprep.subr.mxu0 0.0
    %1040 = vmatpush2.msra.mxu0 0.0
    %1041 = vmatprep.subr.mxu0 0.0
    %1042 = vmatpush2.msra.mxu0 0.0
    %1043 = vmatprep.subr.mxu0 0.0
    %1044 = vmatpush2.msra.mxu0 0.0
    %1045 = vmatprep.subr.mxu0 0.0
    %1046 = vmatpush2.msra.mxu0 0.0
    %1047 = vmatprep.subr.mxu0 0.0
    %1048 = vmatpush2.msra.mxu0 0.0
    %1049 = vmatprep.subr.mxu0 0.0
    %1050 = vmatpush2.msra.mxu0 0.0
    %1051 = vmatprep.subr.mxu0 0.0
    %1052 = vmatpush2.msra.mxu0 0.0
    %1053 = vmatprep.subr.mxu0 0.0
    %1054 = vmatpush2.msra.mxu0 0.0
    %1055 = vmatprep.subr.mxu0 0.0
    %1056 = vmatpush2.msra.mxu0 0.0
    %1057 = vmatprep.subr.mxu0 0.0
    %1058 = vmatpush2.msra.mxu0 0.0
    %1059 = vmatprep.subr.mxu0 0.0
    %1060 = vmatpush2.msra.mxu0 0.0
    %1061 = vmatprep.subr.mxu0 0.0
    %1062 = vmatpush2.msra.mxu0 0.0
    %1063 = vmatprep.mubr.f32.mxu0 0.0
    %1064 = vmatmul.mubr.f32.gmra.mxu0 %v994
    %v1065 = vpop.f32.mrf.mxu0
    %v1066 = vadd.f32 %v992, %v1065
    %v1067 = vpop.f32.mrf.mxu0
    %1068 = vmatprep.mubr.f32.mxu0 0.0
    %1069 = vmatmul.mubr.f32.gmra.mxu0 %v997
    %v1070 = vpop.f32.mrf.mxu0
    %v1071 = vadd.f32 %v992, %v1070
    %v1072 = vpop.f32.mrf.mxu0
    %1073 = vdwg.mxu0
    %v1074 = vadd.f32 %v40, %v1066
    %v1075 = vadd.f32 %v41, %v1071
    %v1076 = vsel %vm76, %v1074, 0.0
    %1077 = vadd.xlane.f32.xlu0 %v1076
    %v1078 = vpop.xlane.xlu0 %1077
    %v1079 = vsel %vm76, %v1075, 0.0
    %1080 = vadd.xlane.f32.xlu0 %v1079
    %v1081 = vpop.xlane.xlu0 %1080
    %v1082 = vrcp.pop 32.0
    %v1083 = vmul.f32 %v1078, %v1082
    %v1084 = vmul.f32 %v1081, %v1082
    %v1085 = vsub.f32 %v1074, %v1083
    %v1086 = vsub.f32 %v1075, %v1084
    %v1087 = vmul.f32 %v1085, %v1085
    %v1088 = vmul.f32 %v1086, %v1086
    %v1089 = vsel %vm76, %v1087, 0.0
    %1090 = vadd.xlane.f32.xlu0 %v1089
    %v1091 = vpop.xlane.xlu0 %1090
    %v1092 = vsel %vm76, %v1088, 0.0
    %1093 = vadd.xlane.f32.xlu0 %v1092
    %v1094 = vpop.xlane.xlu0 %1093
    %v1095 = vmul.f32 %v1091, %v1082
    %v1096 = vmul.f32 %v1094, %v1082
    %v1097 = vadd.f32 %v1095, 1e-05
    %v1098 = vadd.f32 %v1096, 1e-05
    %v1099 = vrsqrt.pop %v1097
    %v1100 = vrsqrt.pop %v1098
    %v1101 = vmul.f32 %v1085, %v1099
    %v1102 = vmul.f32 %v1086, %v1100
    %v1103 = vlaneseq
    %v1104 = vshrl.u32 %v1103, 7
    %v1105 = vsub.s32 0, %v1104
    %v1106 = vrot.slane %v64, %v1105
    %v1107 = vmul.f32 %v1101, %v1106
    %v1108 = vmul.f32 %v1102, %v1106
    %v1109 = vlaneseq
    %v1110 = vshrl.u32 %v1109, 7
    %v1111 = vsub.s32 0, %v1110
    %v1112 = vrot.slane %v65, %v1111
    %v1113 = vadd.f32 %v1107, %v1112
    %v1114 = vadd.f32 %v1108, %v1112
    %v1115 = vlaneseq
    %v1116 = vshrl.u32 %v1115, 7
    %v1117 = vsub.s32 0, %v1116
    %v1118 = vrot.slane %v66, %v1117
    %v1120 = vsel %vm76, %v1113, 0
    %v1123 = vsel %vm76, %v1114, 0
    %1125 = vmatprep.subr.mxu0 0.0
    %1126 = vmatpush1.msra.mxu0 0.0
    %1127 = vmatprep.subr.mxu0 0.0
    %1128 = vmatpush1.msra.mxu0 0.0
    %1129 = vmatprep.subr.mxu0 0.0
    %1130 = vmatpush1.msra.mxu0 0.0
    %1131 = vmatprep.subr.mxu0 0.0
    %1132 = vmatpush1.msra.mxu0 0.0
    %1133 = vmatprep.subr.mxu0 0.0
    %1134 = vmatpush1.msra.mxu0 0.0
    %1135 = vmatprep.subr.mxu0 0.0
    %1136 = vmatpush1.msra.mxu0 0.0
    %1137 = vmatprep.subr.mxu0 0.0
    %1138 = vmatpush1.msra.mxu0 0.0
    %1139 = vmatprep.subr.mxu0 0.0
    %1140 = vmatpush1.msra.mxu0 0.0
    %1141 = vmatprep.subr.mxu0 0.0
    %1142 = vmatpush1.msra.mxu0 0.0
    %1143 = vmatprep.subr.mxu0 0.0
    %1144 = vmatpush1.msra.mxu0 0.0
    %1145 = vmatprep.subr.mxu0 0.0
    %1146 = vmatpush1.msra.mxu0 0.0
    %1147 = vmatprep.subr.mxu0 0.0
    %1148 = vmatpush1.msra.mxu0 0.0
    %1149 = vmatprep.subr.mxu0 0.0
    %1150 = vmatpush1.msra.mxu0 %v53
    %1151 = vmatprep.subr.mxu0 0.0
    %1152 = vmatpush1.msra.mxu0 %v52
    %1153 = vmatprep.subr.mxu0 0.0
    %1154 = vmatpush1.msra.mxu0 %v51
    %1155 = vmatprep.subr.mxu0 0.0
    %1156 = vmatpush1.msra.mxu0 %v50
    %1157 = vmatprep.subr.mxu0 0.0
    %1158 = vmatpush2.msra.mxu0 0.0
    %1159 = vmatprep.subr.mxu0 0.0
    %1160 = vmatpush2.msra.mxu0 0.0
    %1161 = vmatprep.subr.mxu0 0.0
    %1162 = vmatpush2.msra.mxu0 0.0
    %1163 = vmatprep.subr.mxu0 0.0
    %1164 = vmatpush2.msra.mxu0 0.0
    %1165 = vmatprep.subr.mxu0 0.0
    %1166 = vmatpush2.msra.mxu0 0.0
    %1167 = vmatprep.subr.mxu0 0.0
    %1168 = vmatpush2.msra.mxu0 0.0
    %1169 = vmatprep.subr.mxu0 0.0
    %1170 = vmatpush2.msra.mxu0 0.0
    %1171 = vmatprep.subr.mxu0 0.0
    %1172 = vmatpush2.msra.mxu0 0.0
    %1173 = vmatprep.subr.mxu0 0.0
    %1174 = vmatpush2.msra.mxu0 0.0
    %1175 = vmatprep.subr.mxu0 0.0
    %1176 = vmatpush2.msra.mxu0 0.0
    %1177 = vmatprep.subr.mxu0 0.0
    %1178 = vmatpush2.msra.mxu0 0.0
    %1179 = vmatprep.subr.mxu0 0.0
    %1180 = vmatpush2.msra.mxu0 0.0
    %1181 = vmatprep.subr.mxu0 0.0
    %1182 = vmatpush2.msra.mxu0 0.0
    %1183 = vmatprep.subr.mxu0 0.0
    %1184 = vmatpush2.msra.mxu0 0.0
    %1185 = vmatprep.subr.mxu0 0.0
    %1186 = vmatpush2.msra.mxu0 0.0
    %1187 = vmatprep.subr.mxu0 0.0
    %1188 = vmatpush2.msra.mxu0 0.0
    %1189 = vmatprep.mubr.f32.mxu0 0.0
    %1190 = vmatmul.mubr.f32.gmra.mxu0 %v1120
    %v1191 = vpop.f32.mrf.mxu0
    %v1192 = vadd.f32 %v1118, %v1191
    %v1193 = vpop.f32.mrf.mxu0
    %1194 = vmatprep.mubr.f32.mxu0 0.0
    %1195 = vmatmul.mubr.f32.gmra.mxu0 %v1123
    %v1196 = vpop.f32.mrf.mxu0
    %v1197 = vadd.f32 %v1118, %v1196
    %v1198 = vpop.f32.mrf.mxu0
    %1199 = vdwg.mxu0
    %v1200 = vmax.f32 %v1192, 0.0
    %v1201 = vmax.f32 %v1197, 0.0
    %v1202 = vlaneseq
    %v1203 = vshrl.u32 %v1202, 7
    %v1204 = vsub.s32 0, %v1203
    %v1205 = vrot.slane %v67, %v1204
    %vm1206 = vcmask 523264
    %v1208 = vsel %vm1206, %v1200, 0
    %v1211 = vsel %vm1206, %v1201, 0
    %1213 = vmatprep.subr.mxu0 0.0
    %1214 = vmatpush1.msra.mxu0 0.0
    %1215 = vmatprep.subr.mxu0 0.0
    %1216 = vmatpush1.msra.mxu0 0.0
    %1217 = vmatprep.subr.mxu0 0.0
    %1218 = vmatpush1.msra.mxu0 0.0
    %1219 = vmatprep.subr.mxu0 0.0
    %1220 = vmatpush1.msra.mxu0 0.0
    %1221 = vmatprep.subr.mxu0 0.0
    %1222 = vmatpush1.msra.mxu0 0.0
    %1223 = vmatprep.subr.mxu0 0.0
    %1224 = vmatpush1.msra.mxu0 0.0
    %1225 = vmatprep.subr.mxu0 0.0
    %1226 = vmatpush1.msra.mxu0 0.0
    %1227 = vmatprep.subr.mxu0 0.0
    %1228 = vmatpush1.msra.mxu0 0.0
    %1229 = vmatprep.subr.mxu0 0.0
    %1230 = vmatpush1.msra.mxu0 %v61
    %1231 = vmatprep.subr.mxu0 0.0
    %1232 = vmatpush1.msra.mxu0 %v60
    %1233 = vmatprep.subr.mxu0 0.0
    %1234 = vmatpush1.msra.mxu0 %v59
    %1235 = vmatprep.subr.mxu0 0.0
    %1236 = vmatpush1.msra.mxu0 %v58
    %1237 = vmatprep.subr.mxu0 0.0
    %1238 = vmatpush1.msra.mxu0 %v57
    %1239 = vmatprep.subr.mxu0 0.0
    %1240 = vmatpush1.msra.mxu0 %v56
    %1241 = vmatprep.subr.mxu0 0.0
    %1242 = vmatpush1.msra.mxu0 %v55
    %1243 = vmatprep.subr.mxu0 0.0
    %1244 = vmatpush1.msra.mxu0 %v54
    %1245 = vmatprep.subr.mxu0 0.0
    %1246 = vmatpush2.msra.mxu0 0.0
    %1247 = vmatprep.subr.mxu0 0.0
    %1248 = vmatpush2.msra.mxu0 0.0
    %1249 = vmatprep.subr.mxu0 0.0
    %1250 = vmatpush2.msra.mxu0 0.0
    %1251 = vmatprep.subr.mxu0 0.0
    %1252 = vmatpush2.msra.mxu0 0.0
    %1253 = vmatprep.subr.mxu0 0.0
    %1254 = vmatpush2.msra.mxu0 0.0
    %1255 = vmatprep.subr.mxu0 0.0
    %1256 = vmatpush2.msra.mxu0 0.0
    %1257 = vmatprep.subr.mxu0 0.0
    %1258 = vmatpush2.msra.mxu0 0.0
    %1259 = vmatprep.subr.mxu0 0.0
    %1260 = vmatpush2.msra.mxu0 0.0
    %1261 = vmatprep.subr.mxu0 0.0
    %1262 = vmatpush2.msra.mxu0 0.0
    %1263 = vmatprep.subr.mxu0 0.0
    %1264 = vmatpush2.msra.mxu0 0.0
    %1265 = vmatprep.subr.mxu0 0.0
    %1266 = vmatpush2.msra.mxu0 0.0
    %1267 = vmatprep.subr.mxu0 0.0
    %1268 = vmatpush2.msra.mxu0 0.0
    %1269 = vmatprep.subr.mxu0 0.0
    %1270 = vmatpush2.msra.mxu0 0.0
    %1271 = vmatprep.subr.mxu0 0.0
    %1272 = vmatpush2.msra.mxu0 0.0
    %1273 = vmatprep.subr.mxu0 0.0
    %1274 = vmatpush2.msra.mxu0 0.0
    %1275 = vmatprep.subr.mxu0 0.0
    %1276 = vmatpush2.msra.mxu0 0.0
    %1277 = vmatprep.mubr.f32.mxu0 0.0
    %1278 = vmatmul.mubr.f32.gmra.mxu0 %v1208
    %v1279 = vpop.f32.mrf.mxu0
    %v1280 = vadd.f32 %v1205, %v1279
    %v1281 = vpop.f32.mrf.mxu0
    %1282 = vmatprep.mubr.f32.mxu0 0.0
    %1283 = vmatmul.mubr.f32.gmra.mxu0 %v1211
    %v1284 = vpop.f32.mrf.mxu0
    %v1285 = vadd.f32 %v1205, %v1284
    %v1286 = vpop.f32.mrf.mxu0
    %1287 = vdwg.mxu0
    %v1288 = vadd.f32 %v1113, %v1280
    %v1289 = vadd.f32 %v1114, %v1285
    %v1290 = vsel %vm76, %v1288, 0.0
    %1291 = vadd.xlane.f32.xlu0 %v1290
    %v1292 = vpop.xlane.xlu0 %1291
    %v1293 = vsel %vm76, %v1289, 0.0
    %1294 = vadd.xlane.f32.xlu0 %v1293
    %v1295 = vpop.xlane.xlu0 %1294
    %v1296 = vmul.f32 %v1292, %v1082
    %v1297 = vmul.f32 %v1295, %v1082
    %v1298 = vsub.f32 %v1288, %v1296
    %v1299 = vsub.f32 %v1289, %v1297
    %v1300 = vmul.f32 %v1298, %v1298
    %v1301 = vmul.f32 %v1299, %v1299
    %v1302 = vsel %vm76, %v1300, 0.0
    %1303 = vadd.xlane.f32.xlu0 %v1302
    %v1304 = vpop.xlane.xlu0 %1303
    %v1305 = vsel %vm76, %v1301, 0.0
    %1306 = vadd.xlane.f32.xlu0 %v1305
    %v1307 = vpop.xlane.xlu0 %1306
    %v1308 = vmul.f32 %v1304, %v1082
    %v1309 = vmul.f32 %v1307, %v1082
    %v1310 = vadd.f32 %v1308, 1e-05
    %v1311 = vadd.f32 %v1309, 1e-05
    %v1312 = vrsqrt.pop %v1310
    %v1313 = vrsqrt.pop %v1311
    %v1314 = vmul.f32 %v1298, %v1312
    %v1315 = vmul.f32 %v1299, %v1313
    %v1316 = vlaneseq
    %v1317 = vshrl.u32 %v1316, 7
    %v1318 = vsub.s32 0, %v1317
    %v1319 = vrot.slane %v68, %v1318
    %v1320 = vmul.f32 %v1314, %v1319
    %v1321 = vmul.f32 %v1315, %v1319
    %v1322 = vlaneseq
    %v1323 = vshrl.u32 %v1322, 7
    %v1324 = vsub.s32 0, %v1323
    %v1325 = vrot.slane %v69, %v1324
    %v1326 = vadd.f32 %v1320, %v1325
    %v1327 = vadd.f32 %v1321, %v1325
    %1328 = vst.msk [vmem:[#allocation7] sm:$0xff] %vm76, %v1326
    %1329 = vst.msk [vmem:[#allocation7 + $0x8] sm:$0xff] %vm76, %v1327
    // Predicated region
    $region18: #{transformer_layer.1} parent=1 // pred_check
      _
    $region19: #{transformer_layer.1} parent=1 // pred_check_branch
      %1331 = sbr.rel (0) target = $region21
    $region20: #{transformer_layer.1} parent=1 // pred_region
      %s1333 = ssub.s32 256, 256
      %1334 = vsyncadd [#allocation4], %s1333
      %s1335 = sshll.u32 [#allocation7], 4
      %s1336 = int_to_ptr.vmem [resolvable:$true] %s1335
      %1341 = dma.vmem_to_hbm [thread:$0]  %s1336, 256, %s2, [#allocation4], 128, 128, 8
    $region21: #{transformer_layer.1} parent=1 // pred_fallthru
      _
    // Predicated region
    $region22: #{transformer_layer.1} parent=1 // pred_check
      _
    $region23: #{transformer_layer.1} parent=1 // pred_check_branch
      %1343 = sbr.rel (0) target = $region25
    $region24: #{transformer_layer.1} parent=1 // pred_region
      %1344 = dma.done [#allocation4], 256
    $region25: #{transformer_layer.1} parent=1 // pred_fallthru
      _
    %1345 = vsyncpa [#allocation3], 1
    %1346 = vsyncpa [#allocation6], 1
    %1347 = vsyncpa [#allocation4], 1

</llo_original>
